<compile_context>
chip_gen: v7x
topology: tpu7x:2x2x1
jax: 0.10.0
libtpu: 0.0.40
codegen_flags: <defaults>
</compile_context>

<pallas_src>
import functools

import jax
import jax.numpy as jnp
from jax.experimental import pallas as pl
from jax.experimental.pallas import tpu as pltpu

_K = 3                      # kernel_size of all three convs
_DILATIONS = (1, 2, 4)      # conv1..conv3; padding = 2 * dilation for each


def _conv_out_lens(seq_len):
    # L_out = L + 2*padding - dilation*(K-1) = L + 2*dilation  (padding = 2d)
    lens, L = [], seq_len
    for d in _DILATIONS:
        L = L + 2 * d
        lens.append(L)
    return lens


def _pick_batch_block(B, max_bb=8):
    """Largest divisor of B that is <= max_bb while keeping >= 2 grid steps
    (so v7x's two TensorCores both get work).  Degenerates gracefully."""
    if B <= 1:
        return max(B, 1)
    best = 1
    for bb in range(1, min(B // 2, max_bb) + 1):
        if B % bb == 0:
            best = bb
    return best


# ---------------------------------------------------------------------------
# Pallas kernel (whole network, BB samples per grid step, length-major rows)
# ---------------------------------------------------------------------------
def _conv_relu_layer(h_val, cols_ref, w_ref, b_ref, *, bb, dilation):
    """Dilated conv (K=3, padding=2*dilation) + bias + ReLU via one im2col
    matmul over a batch block of `bb` samples stacked length-major
    (row = l*bb + b).  h_val: (L_in*bb, Cin) -> returns (L_out*bb, Cout)."""
    rows, cin = h_val.shape
    l_in = rows // bb
    l_out = l_in + 2 * dilation
    for k in range(_K):
        r0 = (_K - 1 - k) * dilation            # = padding - k*dilation >= 0
        col = pl.ds(k * cin, cin)
        # Zero only the padding bands this tap leaves unwritten (not the whole
        # slab); done every step so megacore cores never see stale scratch.
        if r0 > 0:
            cols_ref[pl.ds(0, r0 * bb), col] = jnp.zeros((r0 * bb, cin),
                                                         jnp.float32)
        tail = l_out - l_in - r0                # = k * dilation
        if tail > 0:
            cols_ref[pl.ds((r0 + l_in) * bb, tail * bb), col] = jnp.zeros(
                (tail * bb, cin), jnp.float32)
        # One contiguous shifted store per tap (the whole batch block shares
        # the same shift because rows are length-major stacked).
        cols_ref[pl.ds(r0 * bb, l_in * bb), col] = h_val
    # One fat matmul per layer (contraction = K*Cin) instead of K thin dots.
    acc = jnp.dot(cols_ref[...], w_ref[...],
                  preferred_element_type=jnp.float32) + b_ref[...]
    return jnp.maximum(acc, 0.0)


def _fused_cnn_kernel(x_ref, w1_ref, b1_ref, w2_ref, b2_ref, w3_ref, b3_ref,
                      wfc_ref, bfc_ref, o_ref,
                      cols1, cols2, cols3, h3_buf, hrow, *, bb):
    # x_ref: (1, L_in*bb, Cin), rows already length-major stacked (l*bb + b).
    h = x_ref[0].astype(jnp.float32)
    for cols, w_ref, b_ref, dilation in (
            (cols1, w1_ref, b1_ref, _DILATIONS[0]),
            (cols2, w2_ref, b2_ref, _DILATIONS[1]),
            (cols3, w3_ref, b3_ref, _DILATIONS[2])):
        h = _conv_relu_layer(h, cols, w_ref, b_ref, bb=bb, dilation=dilation)

    # Flatten (l, c) length-major into lane-dense rows (b, l*C + c): contiguous
    # (bb, C) reads / stores, amortized over the whole batch block.  The FC
    # weight rows were pre-permuted to match, so one 704-deep matmul finishes.
    rows, C = h.shape
    l3 = rows // bb
    h3_buf[...] = h
    for l in range(l3):
        hrow[:, pl.ds(l * C, C)] = h3_buf[pl.ds(l * bb, bb), :]
    y = jnp.dot(hrow[...], wfc_ref[...],
                preferred_element_type=jnp.float32) + bfc_ref[...]
    o_ref[0] = y.astype(o_ref.dtype)


# ---------------------------------------------------------------------------
# Parameter prep (one-time layout plumbing, outside the hot path)
# ---------------------------------------------------------------------------
def prepare_params(params, *, d_model, final_seq_len):
    """Reshape conv weights to im2col form (K*Cin, Cout) and permute the FC
    weight rows from torch's channel-major flatten order (c*L + l) to the
    kernel's length-major order (l*C + c)."""
    C, L = d_model, final_seq_len
    return {
        "w1": params["w1"].reshape(-1, params["w1"].shape[-1]),
        "w2": params["w2"].reshape(-1, params["w2"].shape[-1]),
        "w3": params["w3"].reshape(-1, params["w3"].shape[-1]),
        "b1": params["b1"], "b2": params["b2"], "b3": params["b3"],
        "wfc": params["wfc"].reshape(C, L, -1).transpose(1, 0, 2).reshape(L * C, -1),
        "bfc": params["bfc"],
    }


def cnn_forward(params, x, *, pred_len, output_dim, batch_block=None):
    """x: (B, seq_len, enc_in) -> (B, pred_len, output_dim)."""
    B, L_in, Cin = x.shape
    C = params["w1"].shape[-1]
    L1, L2, L3 = _conv_out_lens(L_in)
    O = pred_len * output_dim
    kp = prepare_params(params, d_model=C, final_seq_len=L3)

    bb = batch_block if batch_block is not None else _pick_batch_block(B)
    assert B % bb == 0, (B, bb)
    nblk = B // bb

    # Layout plumbing (once, in XLA): stack each batch block length-major so
    # every grid step pulls one contiguous (L_in*bb, Cin) slab from HBM.
    x_lm = (x.reshape(nblk, bb, L_in, Cin)
             .transpose(0, 2, 1, 3)
             .reshape(nblk, L_in * bb, Cin))

    kernel = functools.partial(_fused_cnn_kernel, bb=bb)
    out = pl.pallas_call(
        kernel,
        out_shape=jax.ShapeDtypeStruct((nblk, bb, O), x.dtype),
        grid=(nblk,),
        in_specs=[
            pl.BlockSpec((1, L_in * bb, Cin), lambda i: (i, 0, 0)),
            pl.BlockSpec((_K * Cin, C), lambda i: (0, 0)),
            pl.BlockSpec((1, C), lambda i: (0, 0)),
            pl.BlockSpec((_K * C, C), lambda i: (0, 0)),
            pl.BlockSpec((1, C), lambda i: (0, 0)),
            pl.BlockSpec((_K * C, C), lambda i: (0, 0)),
            pl.BlockSpec((1, C), lambda i: (0, 0)),
            pl.BlockSpec((L3 * C, O), lambda i: (0, 0)),
            pl.BlockSpec((1, O), lambda i: (0, 0)),
        ],
        out_specs=pl.BlockSpec((1, bb, O), lambda i: (i, 0, 0)),
        scratch_shapes=[
            pltpu.VMEM((L1 * bb, _K * Cin), jnp.float32),  # im2col slab, layer 1
            pltpu.VMEM((L2 * bb, _K * C), jnp.float32),    # im2col slab, layer 2
            pltpu.VMEM((L3 * bb, _K * C), jnp.float32),    # im2col slab, layer 3
            pltpu.VMEM((L3 * bb, C), jnp.float32),         # conv3 output
            pltpu.VMEM((bb, L3 * C), jnp.float32),         # flattened FC input
        ],
        compiler_params=pltpu.CompilerParams(
            dimension_semantics=("parallel",)),
    )(x_lm, kp["w1"], kp["b1"], kp["w2"], kp["b2"], kp["w3"], kp["b3"],
      kp["wfc"], kp["bfc"])
    return out.reshape(B, pred_len, output_dim)


# ---------------------------------------------------------------------------
# Parameter init (canonical layout: (K, Cin, Cout) convs, torch-order FC rows)
# ---------------------------------------------------------------------------
def init_params(key, *, seq_len, enc_in, d_model, pred_len, output_dim):
    final_seq_len = _conv_out_lens(seq_len)[-1]
    ks = jax.random.split(key, 8)

    def u(k, shape, fan_in):
        bound = 1.0 / jnp.sqrt(jnp.float32(fan_in))
        return jax.random.uniform(k, shape, jnp.float32, -bound, bound)

    params = {
        "w1": u(ks[0], (_K, enc_in, d_model), enc_in * _K),
        "b1": u(ks[1], (1, d_model), enc_in * _K),
        "w2": u(ks[2], (_K, d_model, d_model), d_model * _K),
        "b2": u(ks[3], (1, d_model), d_model * _K),
        "w3": u(ks[4], (_K, d_model, d_model), d_model * _K),
        "b3": u(ks[5], (1, d_model), d_model * _K),
        # rows in torch (C, L) flatten order; permuted once in prepare_params
        "wfc": u(ks[6], (d_model * final_seq_len, pred_len * output_dim),
                 d_model * final_seq_len),
        "bfc": u(ks[7], (1, pred_len * output_dim), d_model * final_seq_len),
    }
    return params, final_seq_len


# ---------------------------------------------------------------------------
# Pure-JAX reference (same math, no Pallas) for the correctness check
# ---------------------------------------------------------------------------
def _ref_conv1d_relu(x_blc, w, b, *, padding, dilation):
    B, L, Cin = x_blc.shape
    K, _, Cout = w.shape
    L_out = L + 2 * padding - dilation * (K - 1)
    x_pad = jnp.pad(x_blc, ((0, 0), (padding, padding), (0, 0)))
    acc = jnp.zeros((B, L_out, Cout), jnp.float32)
    for k in range(K):
        xs = x_pad[:, k * dilation:k * dilation + L_out, :]
        acc = acc + jnp.einsum("blc,co->blo", xs, w[k],
                               preferred_element_type=jnp.float32)
    return jnp.maximum(acc + b[None, :, :], 0.0)


def _ref_forward(params, x, *, pred_len, output_dim):
    h = _ref_conv1d_relu(x, params["w1"], params["b1"], padding=2, dilation=1)
    h = _ref_conv1d_relu(h, params["w2"], params["b2"], padding=4, dilation=2)
    h = _ref_conv1d_relu(h, params["w3"], params["b3"], padding=8, dilation=4)
    B = h.shape[0]
    # torch flattens (B, C, L) -> (B, C*L): channel-major flatten here too.
    h_flat = jnp.transpose(h, (0, 2, 1)).reshape(B, -1)
    y = jnp.dot(h_flat, params["wfc"],
                preferred_element_type=jnp.float32) + params["bfc"]
    return y.reshape(B, pred_len, output_dim)


# ---------------------------------------------------------------------------
if __name__ == "__main__":
    batch, seq_len, enc_in = 8, 8, 4
    d_model, pred_len, output_dim = 32, 4, 2

    key = jax.random.PRNGKey(0)
    pkey, xkey = jax.random.split(key)
    params, final_seq_len = init_params(
        pkey, seq_len=seq_len, enc_in=enc_in, d_model=d_model,
        pred_len=pred_len, output_dim=output_dim)

    x = jax.random.normal(xkey, (batch, seq_len, enc_in), jnp.float32)

    fwd = jax.jit(lambda p, xx: cnn_forward(p, xx, pred_len=pred_len,
                                            output_dim=output_dim))
    out = jax.block_until_ready(fwd(params, x))
    assert out.shape == (batch, pred_len, output_dim), out.shape

    ref = _ref_forward(params, x, pred_len=pred_len, output_dim=output_dim)
    assert jnp.allclose(out, ref, rtol=1e-2, atol=1e-2), \
        float(jnp.max(jnp.abs(out - ref)))

    print("KERNEL_OK")
</pallas_src>

<mosaic_0001>
module attributes {stable_mosaic.version = 11 : i64} {
  func.func @_fused_cnn_kernel(%arg0: i32, %arg1: memref<1x32x4xf32, #tpu.memory_space<vmem>>, %arg2: memref<12x32xf32, #tpu.memory_space<vmem>>, %arg3: memref<1x32xf32, #tpu.memory_space<vmem>>, %arg4: memref<96x32xf32, #tpu.memory_space<vmem>>, %arg5: memref<1x32xf32, #tpu.memory_space<vmem>>, %arg6: memref<96x32xf32, #tpu.memory_space<vmem>>, %arg7: memref<1x32xf32, #tpu.memory_space<vmem>>, %arg8: memref<704x8xf32, #tpu.memory_space<vmem>>, %arg9: memref<1x8xf32, #tpu.memory_space<vmem>>, %arg10: memref<1x4x8xf32, #tpu.memory_space<vmem>>, %arg11: memref<40x12xf32, #tpu.memory_space<vmem>>, %arg12: memref<56x96xf32, #tpu.memory_space<vmem>>, %arg13: memref<88x96xf32, #tpu.memory_space<vmem>>, %arg14: memref<88x32xf32, #tpu.memory_space<vmem>>, %arg15: memref<4x704xf32, #tpu.memory_space<vmem>>) attributes {dimension_semantics = [#tpu.dimension_semantics<parallel>], iteration_bounds = array<i64: 2>, scalar_prefetch = 0 : i64, scratch_operands = 5 : i64, tpu.core_type = #tpu.core_type<tc>, window_params = [{transform_indices = @transform_0, window_bounds = array<i64: 1, 32, 4>}, {pipeline_mode = #tpu.pipeline_mode<synchronous>, transform_indices = @transform_1, window_bounds = array<i64: 12, 32>}, {pipeline_mode = #tpu.pipeline_mode<synchronous>, transform_indices = @transform_2, window_bounds = array<i64: 1, 32>}, {pipeline_mode = #tpu.pipeline_mode<synchronous>, transform_indices = @transform_3, window_bounds = array<i64: 96, 32>}, {pipeline_mode = #tpu.pipeline_mode<synchronous>, transform_indices = @transform_4, window_bounds = array<i64: 1, 32>}, {pipeline_mode = #tpu.pipeline_mode<synchronous>, transform_indices = @transform_5, window_bounds = array<i64: 96, 32>}, {pipeline_mode = #tpu.pipeline_mode<synchronous>, transform_indices = @transform_6, window_bounds = array<i64: 1, 32>}, {pipeline_mode = #tpu.pipeline_mode<synchronous>, transform_indices = @transform_7, window_bounds = array<i64: 704, 8>}, {pipeline_mode = #tpu.pipeline_mode<synchronous>, transform_indices = @transform_8, window_bounds = array<i64: 1, 8>}, {transform_indices = @transform_9, window_bounds = array<i64: 1, 4, 8>}]} {
    %c0 = arith.constant 0 : index
    %c0_0 = arith.constant 0 : index
    %c0_1 = arith.constant 0 : index
    %0 = vector.load %arg1[%c0, %c0_0, %c0_1] : memref<1x32x4xf32, #tpu.memory_space<vmem>>, vector<1x32x4xf32>
    %1 = vector.shape_cast %0 : vector<1x32x4xf32> to vector<32x4xf32>
    %cst = arith.constant 0.000000e+00 : f32
    %2 = vector.broadcast %cst : f32 to vector<8x4xf32>
    %c0_2 = arith.constant 0 : index
    %c0_3 = arith.constant 0 : index
    %3 = vector.load %arg11[%c0_2, %c0_3] : memref<40x12xf32, #tpu.memory_space<vmem>>, vector<8x4xf32>
    tpu.vector_store %arg11[%c0_2, %c0_3], %2 {strides = array<i32>} : memref<40x12xf32, #tpu.memory_space<vmem>>, vector<8x4xf32>,
    %c8 = arith.constant 8 : index
    %c0_4 = arith.constant 0 : index
    %4 = vector.load %arg11[%c8, %c0_4] : memref<40x12xf32, #tpu.memory_space<vmem>>, vector<32x4xf32>
    tpu.vector_store %arg11[%c8, %c0_4], %1 {strides = array<i32>} : memref<40x12xf32, #tpu.memory_space<vmem>>, vector<32x4xf32>,
    %cst_5 = arith.constant 0.000000e+00 : f32
    %5 = vector.broadcast %cst_5 : f32 to vector<4x4xf32>
    %c0_6 = arith.constant 0 : index
    %c4 = arith.constant 4 : index
    %6 = vector.load %arg11[%c0_6, %c4] : memref<40x12xf32, #tpu.memory_space<vmem>>, vector<4x4xf32>
    tpu.vector_store %arg11[%c0_6, %c4], %5 {strides = array<i32>} : memref<40x12xf32, #tpu.memory_space<vmem>>, vector<4x4xf32>,
    %cst_7 = arith.constant 0.000000e+00 : f32
    %7 = vector.broadcast %cst_7 : f32 to vector<4x4xf32>
    %c36 = arith.constant 36 : index
    %c4_8 = arith.constant 4 : index
    %8 = vector.load %arg11[%c36, %c4_8] : memref<40x12xf32, #tpu.memory_space<vmem>>, vector<4x4xf32>
    tpu.vector_store %arg11[%c36, %c4_8], %7 {strides = array<i32>} : memref<40x12xf32, #tpu.memory_space<vmem>>, vector<4x4xf32>,
    %c4_9 = arith.constant 4 : index
    %c4_10 = arith.constant 4 : index
    %9 = vector.load %arg11[%c4_9, %c4_10] : memref<40x12xf32, #tpu.memory_space<vmem>>, vector<32x4xf32>
    tpu.vector_store %arg11[%c4_9, %c4_10], %1 {strides = array<i32>} : memref<40x12xf32, #tpu.memory_space<vmem>>, vector<32x4xf32>,
    %cst_11 = arith.constant 0.000000e+00 : f32
    %10 = vector.broadcast %cst_11 : f32 to vector<8x4xf32>
    %c32 = arith.constant 32 : index
    %c8_12 = arith.constant 8 : index
    %11 = vector.load %arg11[%c32, %c8_12] : memref<40x12xf32, #tpu.memory_space<vmem>>, vector<8x4xf32>
    tpu.vector_store %arg11[%c32, %c8_12], %10 {strides = array<i32>} : memref<40x12xf32, #tpu.memory_space<vmem>>, vector<8x4xf32>,
    %c0_13 = arith.constant 0 : index
    %c8_14 = arith.constant 8 : index
    %12 = vector.load %arg11[%c0_13, %c8_14] : memref<40x12xf32, #tpu.memory_space<vmem>>, vector<32x4xf32>
    tpu.vector_store %arg11[%c0_13, %c8_14], %1 {strides = array<i32>} : memref<40x12xf32, #tpu.memory_space<vmem>>, vector<32x4xf32>,
    %c0_15 = arith.constant 0 : index
    %c0_16 = arith.constant 0 : index
    %13 = vector.load %arg11[%c0_15, %c0_16] : memref<40x12xf32, #tpu.memory_space<vmem>>, vector<40x12xf32>
    %c0_17 = arith.constant 0 : index
    %c0_18 = arith.constant 0 : index
    %14 = vector.load %arg2[%c0_17, %c0_18] : memref<12x32xf32, #tpu.memory_space<vmem>>, vector<12x32xf32>
    %cst_19 = arith.constant dense<0.000000e+00> : vector<40x32xf32>
    %15 = tpu.matmul %13, %14, %cst_19 {dimension_numbers = #tpu.dot_dimension_numbers<[1], [0], [0], [1], [0, 0, 1, 1], [], []>} : vector<40x12xf32>, vector<12x32xf32>, vector<40x32xf32> -> vector<40x32xf32>
    %c0_20 = arith.constant 0 : index
    %c0_21 = arith.constant 0 : index
    %16 = vector.load %arg3[%c0_20, %c0_21] : memref<1x32xf32, #tpu.memory_space<vmem>>, vector<1x32xf32>
    %17 = vector.broadcast %16 : vector<1x32xf32> to vector<40x32xf32>
    %18 = arith.addf %15, %17 : vector<40x32xf32>
    %cst_22 = arith.constant 0.000000e+00 : f32
    %19 = vector.broadcast %cst_22 : f32 to vector<40x32xf32>
    %20 = arith.maximumf %18, %19 : vector<40x32xf32>
    %cst_23 = arith.constant 0.000000e+00 : f32
    %21 = vector.broadcast %cst_23 : f32 to vector<16x32xf32>
    %c0_24 = arith.constant 0 : index
    %c0_25 = arith.constant 0 : index
    %22 = vector.load %arg12[%c0_24, %c0_25] : memref<56x96xf32, #tpu.memory_space<vmem>>, vector<16x32xf32>
    tpu.vector_store %arg12[%c0_24, %c0_25], %21 {strides = array<i32>} : memref<56x96xf32, #tpu.memory_space<vmem>>, vector<16x32xf32>,
    %c16 = arith.constant 16 : index
    %c0_26 = arith.constant 0 : index
    %23 = vector.load %arg12[%c16, %c0_26] : memref<56x96xf32, #tpu.memory_space<vmem>>, vector<40x32xf32>
    tpu.vector_store %arg12[%c16, %c0_26], %20 {strides = array<i32>} : memref<56x96xf32, #tpu.memory_space<vmem>>, vector<40x32xf32>,
    %cst_27 = arith.constant 0.000000e+00 : f32
    %24 = vector.broadcast %cst_27 : f32 to vector<8x32xf32>
    %c0_28 = arith.constant 0 : index
    %c32_29 = arith.constant 32 : index
    %25 = vector.load %arg12[%c0_28, %c32_29] : memref<56x96xf32, #tpu.memory_space<vmem>>, vector<8x32xf32>
    tpu.vector_store %arg12[%c0_28, %c32_29], %24 {strides = array<i32>} : memref<56x96xf32, #tpu.memory_space<vmem>>, vector<8x32xf32>,
    %cst_30 = arith.constant 0.000000e+00 : f32
    %26 = vector.broadcast %cst_30 : f32 to vector<8x32xf32>
    %c48 = arith.constant 48 : index
    %c32_31 = arith.constant 32 : index
    %27 = vector.load %arg12[%c48, %c32_31] : memref<56x96xf32, #tpu.memory_space<vmem>>, vector<8x32xf32>
    tpu.vector_store %arg12[%c48, %c32_31], %26 {strides = array<i32>} : memref<56x96xf32, #tpu.memory_space<vmem>>, vector<8x32xf32>,
    %c8_32 = arith.constant 8 : index
    %c32_33 = arith.constant 32 : index
    %28 = vector.load %arg12[%c8_32, %c32_33] : memref<56x96xf32, #tpu.memory_space<vmem>>, vector<40x32xf32>
    tpu.vector_store %arg12[%c8_32, %c32_33], %20 {strides = array<i32>} : memref<56x96xf32, #tpu.memory_space<vmem>>, vector<40x32xf32>,
    %cst_34 = arith.constant 0.000000e+00 : f32
    %29 = vector.broadcast %cst_34 : f32 to vector<16x32xf32>
    %c40 = arith.constant 40 : index
    %c64 = arith.constant 64 : index
    %30 = vector.load %arg12[%c40, %c64] : memref<56x96xf32, #tpu.memory_space<vmem>>, vector<16x32xf32>
    tpu.vector_store %arg12[%c40, %c64], %29 {strides = array<i32>} : memref<56x96xf32, #tpu.memory_space<vmem>>, vector<16x32xf32>,
    %c0_35 = arith.constant 0 : index
    %c64_36 = arith.constant 64 : index
    %31 = vector.load %arg12[%c0_35, %c64_36] : memref<56x96xf32, #tpu.memory_space<vmem>>, vector<40x32xf32>
    tpu.vector_store %arg12[%c0_35, %c64_36], %20 {strides = array<i32>} : memref<56x96xf32, #tpu.memory_space<vmem>>, vector<40x32xf32>,
    %c0_37 = arith.constant 0 : index
    %c0_38 = arith.constant 0 : index
    %32 = vector.load %arg12[%c0_37, %c0_38] : memref<56x96xf32, #tpu.memory_space<vmem>>, vector<56x96xf32>
    %c0_39 = arith.constant 0 : index
    %c0_40 = arith.constant 0 : index
    %33 = vector.load %arg4[%c0_39, %c0_40] : memref<96x32xf32, #tpu.memory_space<vmem>>, vector<96x32xf32>
    %cst_41 = arith.constant dense<0.000000e+00> : vector<56x32xf32>
    %34 = tpu.matmul %32, %33, %cst_41 {dimension_numbers = #tpu.dot_dimension_numbers<[1], [0], [0], [1], [0, 0, 1, 1], [], []>} : vector<56x96xf32>, vector<96x32xf32>, vector<56x32xf32> -> vector<56x32xf32>
    %c0_42 = arith.constant 0 : index
    %c0_43 = arith.constant 0 : index
    %35 = vector.load %arg5[%c0_42, %c0_43] : memref<1x32xf32, #tpu.memory_space<vmem>>, vector<1x32xf32>
    %36 = vector.broadcast %35 : vector<1x32xf32> to vector<56x32xf32>
    %37 = arith.addf %34, %36 : vector<56x32xf32>
    %cst_44 = arith.constant 0.000000e+00 : f32
    %38 = vector.broadcast %cst_44 : f32 to vector<56x32xf32>
    %39 = arith.maximumf %37, %38 : vector<56x32xf32>
    %cst_45 = arith.constant 0.000000e+00 : f32
    %40 = vector.broadcast %cst_45 : f32 to vector<32x32xf32>
    %c0_46 = arith.constant 0 : index
    %c0_47 = arith.constant 0 : index
    %41 = vector.load %arg13[%c0_46, %c0_47] : memref<88x96xf32, #tpu.memory_space<vmem>>, vector<32x32xf32>
    tpu.vector_store %arg13[%c0_46, %c0_47], %40 {strides = array<i32>} : memref<88x96xf32, #tpu.memory_space<vmem>>, vector<32x32xf32>,
    %c32_48 = arith.constant 32 : index
    %c0_49 = arith.constant 0 : index
    %42 = vector.load %arg13[%c32_48, %c0_49] : memref<88x96xf32, #tpu.memory_space<vmem>>, vector<56x32xf32>
    tpu.vector_store %arg13[%c32_48, %c0_49], %39 {strides = array<i32>} : memref<88x96xf32, #tpu.memory_space<vmem>>, vector<56x32xf32>,
    %cst_50 = arith.constant 0.000000e+00 : f32
    %43 = vector.broadcast %cst_50 : f32 to vector<16x32xf32>
    %c0_51 = arith.constant 0 : index
    %c32_52 = arith.constant 32 : index
    %44 = vector.load %arg13[%c0_51, %c32_52] : memref<88x96xf32, #tpu.memory_space<vmem>>, vector<16x32xf32>
    tpu.vector_store %arg13[%c0_51, %c32_52], %43 {strides = array<i32>} : memref<88x96xf32, #tpu.memory_space<vmem>>, vector<16x32xf32>,
    %cst_53 = arith.constant 0.000000e+00 : f32
    %45 = vector.broadcast %cst_53 : f32 to vector<16x32xf32>
    %c72 = arith.constant 72 : index
    %c32_54 = arith.constant 32 : index
    %46 = vector.load %arg13[%c72, %c32_54] : memref<88x96xf32, #tpu.memory_space<vmem>>, vector<16x32xf32>
    tpu.vector_store %arg13[%c72, %c32_54], %45 {strides = array<i32>} : memref<88x96xf32, #tpu.memory_space<vmem>>, vector<16x32xf32>,
    %c16_55 = arith.constant 16 : index
    %c32_56 = arith.constant 32 : index
    %47 = vector.load %arg13[%c16_55, %c32_56] : memref<88x96xf32, #tpu.memory_space<vmem>>, vector<56x32xf32>
    tpu.vector_store %arg13[%c16_55, %c32_56], %39 {strides = array<i32>} : memref<88x96xf32, #tpu.memory_space<vmem>>, vector<56x32xf32>,
    %cst_57 = arith.constant 0.000000e+00 : f32
    %48 = vector.broadcast %cst_57 : f32 to vector<32x32xf32>
    %c56 = arith.constant 56 : index
    %c64_58 = arith.constant 64 : index
    %49 = vector.load %arg13[%c56, %c64_58] : memref<88x96xf32, #tpu.memory_space<vmem>>, vector<32x32xf32>
    tpu.vector_store %arg13[%c56, %c64_58], %48 {strides = array<i32>} : memref<88x96xf32, #tpu.memory_space<vmem>>, vector<32x32xf32>,
    %c0_59 = arith.constant 0 : index
    %c64_60 = arith.constant 64 : index
    %50 = vector.load %arg13[%c0_59, %c64_60] : memref<88x96xf32, #tpu.memory_space<vmem>>, vector<56x32xf32>
    tpu.vector_store %arg13[%c0_59, %c64_60], %39 {strides = array<i32>} : memref<88x96xf32, #tpu.memory_space<vmem>>, vector<56x32xf32>,
    %c0_61 = arith.constant 0 : index
    %c0_62 = arith.constant 0 : index
    %51 = vector.load %arg13[%c0_61, %c0_62] : memref<88x96xf32, #tpu.memory_space<vmem>>, vector<88x96xf32>
    %c0_63 = arith.constant 0 : index
    %c0_64 = arith.constant 0 : index
    %52 = vector.load %arg6[%c0_63, %c0_64] : memref<96x32xf32, #tpu.memory_space<vmem>>, vector<96x32xf32>
    %cst_65 = arith.constant dense<0.000000e+00> : vector<88x32xf32>
    %53 = tpu.matmul %51, %52, %cst_65 {dimension_numbers = #tpu.dot_dimension_numbers<[1], [0], [0], [1], [0, 0, 1, 1], [], []>} : vector<88x96xf32>, vector<96x32xf32>, vector<88x32xf32> -> vector<88x32xf32>
    %c0_66 = arith.constant 0 : index
    %c0_67 = arith.constant 0 : index
    %54 = vector.load %arg7[%c0_66, %c0_67] : memref<1x32xf32, #tpu.memory_space<vmem>>, vector<1x32xf32>
    %55 = vector.broadcast %54 : vector<1x32xf32> to vector<88x32xf32>
    %56 = arith.addf %53, %55 : vector<88x32xf32>
    %cst_68 = arith.constant 0.000000e+00 : f32
    %57 = vector.broadcast %cst_68 : f32 to vector<88x32xf32>
    %58 = arith.maximumf %56, %57 : vector<88x32xf32>
    %c0_69 = arith.constant 0 : index
    %c0_70 = arith.constant 0 : index
    %59 = vector.load %arg14[%c0_69, %c0_70] : memref<88x32xf32, #tpu.memory_space<vmem>>, vector<88x32xf32>
    tpu.vector_store %arg14[%c0_69, %c0_70], %58 {strides = array<i32>} : memref<88x32xf32, #tpu.memory_space<vmem>>, vector<88x32xf32>,
    %c0_71 = arith.constant 0 : index
    %c0_72 = arith.constant 0 : index
    %60 = vector.load %arg14[%c0_71, %c0_72] : memref<88x32xf32, #tpu.memory_space<vmem>>, vector<4x32xf32>
    %c0_73 = arith.constant 0 : index
    %c0_74 = arith.constant 0 : index
    %61 = vector.load %arg15[%c0_73, %c0_74] : memref<4x704xf32, #tpu.memory_space<vmem>>, vector<4x32xf32>
    tpu.vector_store %arg15[%c0_73, %c0_74], %60 {strides = array<i32>} : memref<4x704xf32, #tpu.memory_space<vmem>>, vector<4x32xf32>,
    %c4_75 = arith.constant 4 : index
    %c0_76 = arith.constant 0 : index
    %62 = vector.load %arg14[%c4_75, %c0_76] : memref<88x32xf32, #tpu.memory_space<vmem>>, vector<4x32xf32>
    %c0_77 = arith.constant 0 : index
    %c32_78 = arith.constant 32 : index
    %63 = vector.load %arg15[%c0_77, %c32_78] : memref<4x704xf32, #tpu.memory_space<vmem>>, vector<4x32xf32>
    tpu.vector_store %arg15[%c0_77, %c32_78], %62 {strides = array<i32>} : memref<4x704xf32, #tpu.memory_space<vmem>>, vector<4x32xf32>,
    %c8_79 = arith.constant 8 : index
    %c0_80 = arith.constant 0 : index
    %64 = vector.load %arg14[%c8_79, %c0_80] : memref<88x32xf32, #tpu.memory_space<vmem>>, vector<4x32xf32>
    %c0_81 = arith.constant 0 : index
    %c64_82 = arith.constant 64 : index
    %65 = vector.load %arg15[%c0_81, %c64_82] : memref<4x704xf32, #tpu.memory_space<vmem>>, vector<4x32xf32>
    tpu.vector_store %arg15[%c0_81, %c64_82], %64 {strides = array<i32>} : memref<4x704xf32, #tpu.memory_space<vmem>>, vector<4x32xf32>,
    %c12 = arith.constant 12 : index
    %c0_83 = arith.constant 0 : index
    %66 = vector.load %arg14[%c12, %c0_83] : memref<88x32xf32, #tpu.memory_space<vmem>>, vector<4x32xf32>
    %c0_84 = arith.constant 0 : index
    %c96 = arith.constant 96 : index
    %67 = vector.load %arg15[%c0_84, %c96] : memref<4x704xf32, #tpu.memory_space<vmem>>, vector<4x32xf32>
    tpu.vector_store %arg15[%c0_84, %c96], %66 {strides = array<i32>} : memref<4x704xf32, #tpu.memory_space<vmem>>, vector<4x32xf32>,
    %c16_85 = arith.constant 16 : index
    %c0_86 = arith.constant 0 : index
    %68 = vector.load %arg14[%c16_85, %c0_86] : memref<88x32xf32, #tpu.memory_space<vmem>>, vector<4x32xf32>
    %c0_87 = arith.constant 0 : index
    %c128 = arith.constant 128 : index
    %69 = vector.load %arg15[%c0_87, %c128] : memref<4x704xf32, #tpu.memory_space<vmem>>, vector<4x32xf32>
    tpu.vector_store %arg15[%c0_87, %c128], %68 {strides = array<i32>} : memref<4x704xf32, #tpu.memory_space<vmem>>, vector<4x32xf32>,
    %c20 = arith.constant 20 : index
    %c0_88 = arith.constant 0 : index
    %70 = vector.load %arg14[%c20, %c0_88] : memref<88x32xf32, #tpu.memory_space<vmem>>, vector<4x32xf32>
    %c0_89 = arith.constant 0 : index
    %c160 = arith.constant 160 : index
    %71 = vector.load %arg15[%c0_89, %c160] : memref<4x704xf32, #tpu.memory_space<vmem>>, vector<4x32xf32>
    tpu.vector_store %arg15[%c0_89, %c160], %70 {strides = array<i32>} : memref<4x704xf32, #tpu.memory_space<vmem>>, vector<4x32xf32>,
    %c24 = arith.constant 24 : index
    %c0_90 = arith.constant 0 : index
    %72 = vector.load %arg14[%c24, %c0_90] : memref<88x32xf32, #tpu.memory_space<vmem>>, vector<4x32xf32>
    %c0_91 = arith.constant 0 : index
    %c192 = arith.constant 192 : index
    %73 = vector.load %arg15[%c0_91, %c192] : memref<4x704xf32, #tpu.memory_space<vmem>>, vector<4x32xf32>
    tpu.vector_store %arg15[%c0_91, %c192], %72 {strides = array<i32>} : memref<4x704xf32, #tpu.memory_space<vmem>>, vector<4x32xf32>,
    %c28 = arith.constant 28 : index
    %c0_92 = arith.constant 0 : index
    %74 = vector.load %arg14[%c28, %c0_92] : memref<88x32xf32, #tpu.memory_space<vmem>>, vector<4x32xf32>
    %c0_93 = arith.constant 0 : index
    %c224 = arith.constant 224 : index
    %75 = vector.load %arg15[%c0_93, %c224] : memref<4x704xf32, #tpu.memory_space<vmem>>, vector<4x32xf32>
    tpu.vector_store %arg15[%c0_93, %c224], %74 {strides = array<i32>} : memref<4x704xf32, #tpu.memory_space<vmem>>, vector<4x32xf32>,
    %c32_94 = arith.constant 32 : index
    %c0_95 = arith.constant 0 : index
    %76 = vector.load %arg14[%c32_94, %c0_95] : memref<88x32xf32, #tpu.memory_space<vmem>>, vector<4x32xf32>
    %c0_96 = arith.constant 0 : index
    %c256 = arith.constant 256 : index
    %77 = vector.load %arg15[%c0_96, %c256] : memref<4x704xf32, #tpu.memory_space<vmem>>, vector<4x32xf32>
    tpu.vector_store %arg15[%c0_96, %c256], %76 {strides = array<i32>} : memref<4x704xf32, #tpu.memory_space<vmem>>, vector<4x32xf32>,
    %c36_97 = arith.constant 36 : index
    %c0_98 = arith.constant 0 : index
    %78 = vector.load %arg14[%c36_97, %c0_98] : memref<88x32xf32, #tpu.memory_space<vmem>>, vector<4x32xf32>
    %c0_99 = arith.constant 0 : index
    %c288 = arith.constant 288 : index
    %79 = vector.load %arg15[%c0_99, %c288] : memref<4x704xf32, #tpu.memory_space<vmem>>, vector<4x32xf32>
    tpu.vector_store %arg15[%c0_99, %c288], %78 {strides = array<i32>} : memref<4x704xf32, #tpu.memory_space<vmem>>, vector<4x32xf32>,
    %c40_100 = arith.constant 40 : index
    %c0_101 = arith.constant 0 : index
    %80 = vector.load %arg14[%c40_100, %c0_101] : memref<88x32xf32, #tpu.memory_space<vmem>>, vector<4x32xf32>
    %c0_102 = arith.constant 0 : index
    %c320 = arith.constant 320 : index
    %81 = vector.load %arg15[%c0_102, %c320] : memref<4x704xf32, #tpu.memory_space<vmem>>, vector<4x32xf32>
    tpu.vector_store %arg15[%c0_102, %c320], %80 {strides = array<i32>} : memref<4x704xf32, #tpu.memory_space<vmem>>, vector<4x32xf32>,
    %c44 = arith.constant 44 : index
    %c0_103 = arith.constant 0 : index
    %82 = vector.load %arg14[%c44, %c0_103] : memref<88x32xf32, #tpu.memory_space<vmem>>, vector<4x32xf32>
    %c0_104 = arith.constant 0 : index
    %c352 = arith.constant 352 : index
    %83 = vector.load %arg15[%c0_104, %c352] : memref<4x704xf32, #tpu.memory_space<vmem>>, vector<4x32xf32>
    tpu.vector_store %arg15[%c0_104, %c352], %82 {strides = array<i32>} : memref<4x704xf32, #tpu.memory_space<vmem>>, vector<4x32xf32>,
    %c48_105 = arith.constant 48 : index
    %c0_106 = arith.constant 0 : index
    %84 = vector.load %arg14[%c48_105, %c0_106] : memref<88x32xf32, #tpu.memory_space<vmem>>, vector<4x32xf32>
    %c0_107 = arith.constant 0 : index
    %c384 = arith.constant 384 : index
    %85 = vector.load %arg15[%c0_107, %c384] : memref<4x704xf32, #tpu.memory_space<vmem>>, vector<4x32xf32>
    tpu.vector_store %arg15[%c0_107, %c384], %84 {strides = array<i32>} : memref<4x704xf32, #tpu.memory_space<vmem>>, vector<4x32xf32>,
    %c52 = arith.constant 52 : index
    %c0_108 = arith.constant 0 : index
    %86 = vector.load %arg14[%c52, %c0_108] : memref<88x32xf32, #tpu.memory_space<vmem>>, vector<4x32xf32>
    %c0_109 = arith.constant 0 : index
    %c416 = arith.constant 416 : index
    %87 = vector.load %arg15[%c0_109, %c416] : memref<4x704xf32, #tpu.memory_space<vmem>>, vector<4x32xf32>
    tpu.vector_store %arg15[%c0_109, %c416], %86 {strides = array<i32>} : memref<4x704xf32, #tpu.memory_space<vmem>>, vector<4x32xf32>,
    %c56_110 = arith.constant 56 : index
    %c0_111 = arith.constant 0 : index
    %88 = vector.load %arg14[%c56_110, %c0_111] : memref<88x32xf32, #tpu.memory_space<vmem>>, vector<4x32xf32>
    %c0_112 = arith.constant 0 : index
    %c448 = arith.constant 448 : index
    %89 = vector.load %arg15[%c0_112, %c448] : memref<4x704xf32, #tpu.memory_space<vmem>>, vector<4x32xf32>
    tpu.vector_store %arg15[%c0_112, %c448], %88 {strides = array<i32>} : memref<4x704xf32, #tpu.memory_space<vmem>>, vector<4x32xf32>,
    %c60 = arith.constant 60 : index
    %c0_113 = arith.constant 0 : index
    %90 = vector.load %arg14[%c60, %c0_113] : memref<88x32xf32, #tpu.memory_space<vmem>>, vector<4x32xf32>
    %c0_114 = arith.constant 0 : index
    %c480 = arith.constant 480 : index
    %91 = vector.load %arg15[%c0_114, %c480] : memref<4x704xf32, #tpu.memory_space<vmem>>, vector<4x32xf32>
    tpu.vector_store %arg15[%c0_114, %c480], %90 {strides = array<i32>} : memref<4x704xf32, #tpu.memory_space<vmem>>, vector<4x32xf32>,
    %c64_115 = arith.constant 64 : index
    %c0_116 = arith.constant 0 : index
    %92 = vector.load %arg14[%c64_115, %c0_116] : memref<88x32xf32, #tpu.memory_space<vmem>>, vector<4x32xf32>
    %c0_117 = arith.constant 0 : index
    %c512 = arith.constant 512 : index
    %93 = vector.load %arg15[%c0_117, %c512] : memref<4x704xf32, #tpu.memory_space<vmem>>, vector<4x32xf32>
    tpu.vector_store %arg15[%c0_117, %c512], %92 {strides = array<i32>} : memref<4x704xf32, #tpu.memory_space<vmem>>, vector<4x32xf32>,
    %c68 = arith.constant 68 : index
    %c0_118 = arith.constant 0 : index
    %94 = vector.load %arg14[%c68, %c0_118] : memref<88x32xf32, #tpu.memory_space<vmem>>, vector<4x32xf32>
    %c0_119 = arith.constant 0 : index
    %c544 = arith.constant 544 : index
    %95 = vector.load %arg15[%c0_119, %c544] : memref<4x704xf32, #tpu.memory_space<vmem>>, vector<4x32xf32>
    tpu.vector_store %arg15[%c0_119, %c544], %94 {strides = array<i32>} : memref<4x704xf32, #tpu.memory_space<vmem>>, vector<4x32xf32>,
    %c72_120 = arith.constant 72 : index
    %c0_121 = arith.constant 0 : index
    %96 = vector.load %arg14[%c72_120, %c0_121] : memref<88x32xf32, #tpu.memory_space<vmem>>, vector<4x32xf32>
    %c0_122 = arith.constant 0 : index
    %c576 = arith.constant 576 : index
    %97 = vector.load %arg15[%c0_122, %c576] : memref<4x704xf32, #tpu.memory_space<vmem>>, vector<4x32xf32>
    tpu.vector_store %arg15[%c0_122, %c576], %96 {strides = array<i32>} : memref<4x704xf32, #tpu.memory_space<vmem>>, vector<4x32xf32>,
    %c76 = arith.constant 76 : index
    %c0_123 = arith.constant 0 : index
    %98 = vector.load %arg14[%c76, %c0_123] : memref<88x32xf32, #tpu.memory_space<vmem>>, vector<4x32xf32>
    %c0_124 = arith.constant 0 : index
    %c608 = arith.constant 608 : index
    %99 = vector.load %arg15[%c0_124, %c608] : memref<4x704xf32, #tpu.memory_space<vmem>>, vector<4x32xf32>
    tpu.vector_store %arg15[%c0_124, %c608], %98 {strides = array<i32>} : memref<4x704xf32, #tpu.memory_space<vmem>>, vector<4x32xf32>,
    %c80 = arith.constant 80 : index
    %c0_125 = arith.constant 0 : index
    %100 = vector.load %arg14[%c80, %c0_125] : memref<88x32xf32, #tpu.memory_space<vmem>>, vector<4x32xf32>
    %c0_126 = arith.constant 0 : index
    %c640 = arith.constant 640 : index
    %101 = vector.load %arg15[%c0_126, %c640] : memref<4x704xf32, #tpu.memory_space<vmem>>, vector<4x32xf32>
    tpu.vector_store %arg15[%c0_126, %c640], %100 {strides = array<i32>} : memref<4x704xf32, #tpu.memory_space<vmem>>, vector<4x32xf32>,
    %c84 = arith.constant 84 : index
    %c0_127 = arith.constant 0 : index
    %102 = vector.load %arg14[%c84, %c0_127] : memref<88x32xf32, #tpu.memory_space<vmem>>, vector<4x32xf32>
    %c0_128 = arith.constant 0 : index
    %c672 = arith.constant 672 : index
    %103 = vector.load %arg15[%c0_128, %c672] : memref<4x704xf32, #tpu.memory_space<vmem>>, vector<4x32xf32>
    tpu.vector_store %arg15[%c0_128, %c672], %102 {strides = array<i32>} : memref<4x704xf32, #tpu.memory_space<vmem>>, vector<4x32xf32>,
    %c0_129 = arith.constant 0 : index
    %c0_130 = arith.constant 0 : index
    %104 = vector.load %arg15[%c0_129, %c0_130] : memref<4x704xf32, #tpu.memory_space<vmem>>, vector<4x704xf32>
    %c0_131 = arith.constant 0 : index
    %c0_132 = arith.constant 0 : index
    %105 = vector.load %arg8[%c0_131, %c0_132] : memref<704x8xf32, #tpu.memory_space<vmem>>, vector<704x8xf32>
    %cst_133 = arith.constant dense<0.000000e+00> : vector<4x8xf32>
    %106 = tpu.matmul %104, %105, %cst_133 {dimension_numbers = #tpu.dot_dimension_numbers<[1], [0], [0], [1], [0, 0, 1, 1], [], []>} : vector<4x704xf32>, vector<704x8xf32>, vector<4x8xf32> -> vector<4x8xf32>
    %c0_134 = arith.constant 0 : index
    %c0_135 = arith.constant 0 : index
    %107 = vector.load %arg9[%c0_134, %c0_135] : memref<1x8xf32, #tpu.memory_space<vmem>>, vector<1x8xf32>
    %108 = vector.broadcast %107 : vector<1x8xf32> to vector<4x8xf32>
    %109 = arith.addf %106, %108 : vector<4x8xf32>
    %c0_136 = arith.constant 0 : index
    %c0_137 = arith.constant 0 : index
    %c0_138 = arith.constant 0 : index
    %110 = vector.load %arg10[%c0_136, %c0_137, %c0_138] : memref<1x4x8xf32, #tpu.memory_space<vmem>>, vector<1x4x8xf32>
    %111 = vector.shape_cast %110 : vector<1x4x8xf32> to vector<4x8xf32>
    %112 = vector.shape_cast %109 : vector<4x8xf32> to vector<1x4x8xf32>
    tpu.vector_store %arg10[%c0_136, %c0_137, %c0_138], %112 {strides = array<i32>} : memref<1x4x8xf32, #tpu.memory_space<vmem>>, vector<1x4x8xf32>,
    return
  }
  func.func @transform_0(%arg0: i32) -> (i32, i32, i32) {
    %c0_i32 = arith.constant 0 : i32
    %c0_i32_0 = arith.constant 0 : i32
    %c0_i32_1 = arith.constant 0 : i32
    return %arg0, %c0_i32, %c0_i32_0 : i32, i32, i32
  }
  func.func @transform_1(%arg0: i32) -> (i32, i32) {
    %c0_i32 = arith.constant 0 : i32
    %c0_i32_0 = arith.constant 0 : i32
    %c0_i32_1 = arith.constant 0 : i32
    return %c0_i32, %c0_i32_0 : i32, i32
  }
  func.func @transform_2(%arg0: i32) -> (i32, i32) {
    %c0_i32 = arith.constant 0 : i32
    %c0_i32_0 = arith.constant 0 : i32
    %c0_i32_1 = arith.constant 0 : i32
    return %c0_i32, %c0_i32_0 : i32, i32
  }
  func.func @transform_3(%arg0: i32) -> (i32, i32) {
    %c0_i32 = arith.constant 0 : i32
    %c0_i32_0 = arith.constant 0 : i32
    %c0_i32_1 = arith.constant 0 : i32
    return %c0_i32, %c0_i32_0 : i32, i32
  }
  func.func @transform_4(%arg0: i32) -> (i32, i32) {
    %c0_i32 = arith.constant 0 : i32
    %c0_i32_0 = arith.constant 0 : i32
    %c0_i32_1 = arith.constant 0 : i32
    return %c0_i32, %c0_i32_0 : i32, i32
  }
  func.func @transform_5(%arg0: i32) -> (i32, i32) {
    %c0_i32 = arith.constant 0 : i32
    %c0_i32_0 = arith.constant 0 : i32
    %c0_i32_1 = arith.constant 0 : i32
    return %c0_i32, %c0_i32_0 : i32, i32
  }
  func.func @transform_6(%arg0: i32) -> (i32, i32) {
    %c0_i32 = arith.constant 0 : i32
    %c0_i32_0 = arith.constant 0 : i32
    %c0_i32_1 = arith.constant 0 : i32
    return %c0_i32, %c0_i32_0 : i32, i32
  }
  func.func @transform_7(%arg0: i32) -> (i32, i32) {
    %c0_i32 = arith.constant 0 : i32
    %c0_i32_0 = arith.constant 0 : i32
    %c0_i32_1 = arith.constant 0 : i32
    return %c0_i32, %c0_i32_0 : i32, i32
  }
  func.func @transform_8(%arg0: i32) -> (i32, i32) {
    %c0_i32 = arith.constant 0 : i32
    %c0_i32_0 = arith.constant 0 : i32
    %c0_i32_1 = arith.constant 0 : i32
    return %c0_i32, %c0_i32_0 : i32, i32
  }
  func.func @transform_9(%arg0: i32) -> (i32, i32, i32) {
    %c0_i32 = arith.constant 0 : i32
    %c0_i32_0 = arith.constant 0 : i32
    %c0_i32_1 = arith.constant 0 : i32
    return %arg0, %c0_i32, %c0_i32_0 : i32, i32, i32
  }
}

</mosaic_0001>

<llo_original>
// kernel: _lambda_.1
$region0: #{_lambda_.1}
  #allocation0 [shape = 'u32[]', space=smem, size = 0x4, offset = 0x4, fixed_abs, tag = 'smem constant byte address 0x4 - core index']
  #allocation1 [shape = 'u32[144,128]{1,0:T(1,128)}', space=vmem, size = 0x12000, scoped, tag = 'internal scratch']
  #allocation2 [shape = 'f32[40,12]{1,0:T(8,128)}', space=vmem, size = 0x5000, scoped, tag = 'scratch operand']
  #allocation3 [shape = 'f32[56,96]{1,0:T(8,128)}', space=vmem, size = 0x7000, scoped, tag = 'scratch operand']
  #allocation4 [shape = 'f32[88,96]{1,0:T(8,128)}', space=vmem, size = 0xb000, scoped, tag = 'scratch operand']
  #allocation5 [shape = 'f32[88,32]{1,0:T(8,128)}', space=vmem, size = 0xb000, scoped, tag = 'scratch operand']
  #allocation6 [shape = 'f32[4,704]{1,0:T(4,128)}', space=vmem, size = 0x3000, scoped, tag = 'scratch operand']
  %s0 = inlined_call_operand.vmem [shape: f32[2,32,4], index: 0, kind: input, shape index: {}]
  %s1 = inlined_call_operand.vmem [shape: f32[12,32], index: 1, kind: input, shape index: {}]
  %s2 = inlined_call_operand.vmem [shape: f32[1,32], index: 2, kind: input, shape index: {}]
  %s3 = inlined_call_operand.vmem [shape: f32[96,32], index: 3, kind: input, shape index: {}]
  %s4 = inlined_call_operand.vmem [shape: f32[1,32], index: 4, kind: input, shape index: {}]
  %s5 = inlined_call_operand.vmem [shape: f32[96,32], index: 5, kind: input, shape index: {}]
  %s6 = inlined_call_operand.vmem [shape: f32[1,32], index: 6, kind: input, shape index: {}]
  %s7 = inlined_call_operand.vmem [shape: f32[704,8], index: 7, kind: input, shape index: {}]
  %s8 = inlined_call_operand.vmem [shape: f32[1,8], index: 8, kind: input, shape index: {}]
  %s9 = inlined_call_operand.vmem [shape: f32[2,4,8], index: 9, kind: output, shape index: {}]
  %s10 = sld [smem:[#allocation0]]
  $region69: #{_lambda_.1} parent=0
    _
  %s12 = ssub.s32 1, %s10
  %s13 = scalar_select 0, %s12, %s10
  loop: start=0, step=1, limit=4
  $region2: #{_lambda_.1} parent=0 // loop_pre_header
    _
  $region3: #{_lambda_.1} parent=0 // loop_header
    %s15 = sphi 0, %s19
    %p16 = scmp.ge.s32.totalorder %s15, 4
    %s25 = sphi 0, %s27
    %s28 = sphi 0, %s25
    %s29 = sphi 0, %s28
    %s45 = sphi 0, %s29
    %s49 = sphi 0, %s49
    %s51 = sphi 0, %s49
    %s52 = sphi 0, %s51
    %s66 = sphi 0, %s52
    %s70 = sphi 0, %s70
    %s72 = sphi 0, %s70
    %s73 = sphi 0, %s72
    %s87 = sphi 0, %s73
    %s91 = sphi 0, %s91
    %s93 = sphi 0, %s91
    %s94 = sphi 0, %s93
    %s108 = sphi 0, %s94
    %s112 = sphi 0, %s112
    %s114 = sphi 0, %s112
    %s115 = sphi 0, %s114
    %s129 = sphi 0, %s115
    %s133 = sphi 0, %s133
    %s135 = sphi 0, %s133
    %s136 = sphi 0, %s135
    %s150 = sphi 0, %s136
    %s154 = sphi 0, %s154
    %s156 = sphi 0, %s154
    %s157 = sphi 0, %s156
    %s171 = sphi 0, %s157
    %s175 = sphi 0, %s175
    %s177 = sphi 0, %s175
    %s178 = sphi 0, %s177
    %s192 = sphi 0, %s178
    %s196 = sphi 0, %s196
    %s198 = sphi 0, %s196
    %s199 = sphi 0, %s198
    %s213 = sphi 0, %s199
    %s219 = sphi 0, %s221
    %s222 = sphi 0, %s219
    %s223 = sphi 0, %s222
    %s239 = sphi 0, %s223
  $region4: #{_lambda_.1} parent=0 // loop_header_branch
    %18 = sbr.rel (%p16) target = $region8
  $region5: #{_lambda_.1} parent=0 // loop_body
    %s20 = ssub.s32 %s15, 1
    %s21 = ssub.s32 %s15, 2
    %s22 = sadd.s32 %s15, 1
    %s23 = ssub.s32 %s15, %s22
    %p24 = scmp.eq.s32.totalorder %s23, 0
    %s26 = sadd.s32 %s25, 1
    %s27 = scalar_select %p24, %s25, %s26
    %p30 = pneg %p24
    %p31 = scmp.eq.s32.totalorder %s15, 1
    %p32 = por %p30, %p31
    %p33 = scmp.ne.s32.totalorder %s25, %s28
    %p34 = scmp.eq.s32.totalorder %s15, 0
    %p35 = por %p33, %p34
    %p36 = scmp.ne.s32.totalorder %s25, %s28
    %p37 = scmp.eq.s32.totalorder %s20, 1
    %p38 = por %p36, %p37
    %p39 = scmp.ne.s32.totalorder %s28, %s29
    %p40 = scmp.eq.s32.totalorder %s20, 0
    %p41 = por %p39, %p40
    %p42 = scmp.ne.s32.totalorder %s28, %s29
    %p43 = scmp.eq.s32.totalorder %s21, 1
    %p44 = por %p42, %p43
    %p46 = scmp.ne.s32.totalorder %s29, %s45
    %p47 = scmp.eq.s32.totalorder %s21, 0
    %p48 = por %p46, %p47
    %s50 = sadd.s32 %s49, 1
    %p53 = scmp.eq.s32.totalorder %s15, 1
    %p54 = scmp.ne.s32.totalorder %s49, %s51
    %p55 = scmp.eq.s32.totalorder %s15, 0
    %p56 = por %p54, %p55
    %p57 = scmp.ne.s32.totalorder %s49, %s51
    %p58 = scmp.eq.s32.totalorder %s20, 1
    %p59 = por %p57, %p58
    %p60 = scmp.ne.s32.totalorder %s51, %s52
    %p61 = scmp.eq.s32.totalorder %s20, 0
    %p62 = por %p60, %p61
    %p63 = scmp.ne.s32.totalorder %s51, %s52
    %p64 = scmp.eq.s32.totalorder %s21, 1
    %p65 = por %p63, %p64
    %p67 = scmp.ne.s32.totalorder %s52, %s66
    %p68 = scmp.eq.s32.totalorder %s21, 0
    %p69 = por %p67, %p68
    %s71 = sadd.s32 %s70, 1
    %p74 = scmp.eq.s32.totalorder %s15, 1
    %p75 = scmp.ne.s32.totalorder %s70, %s72
    %p76 = scmp.eq.s32.totalorder %s15, 0
    %p77 = por %p75, %p76
    %p78 = scmp.ne.s32.totalorder %s70, %s72
    %p79 = scmp.eq.s32.totalorder %s20, 1
    %p80 = por %p78, %p79
    %p81 = scmp.ne.s32.totalorder %s72, %s73
    %p82 = scmp.eq.s32.totalorder %s20, 0
    %p83 = por %p81, %p82
    %p84 = scmp.ne.s32.totalorder %s72, %s73
    %p85 = scmp.eq.s32.totalorder %s21, 1
    %p86 = por %p84, %p85
    %p88 = scmp.ne.s32.totalorder %s73, %s87
    %p89 = scmp.eq.s32.totalorder %s21, 0
    %p90 = por %p88, %p89
    %s92 = sadd.s32 %s91, 1
    %p95 = scmp.eq.s32.totalorder %s15, 1
    %p96 = scmp.ne.s32.totalorder %s91, %s93
    %p97 = scmp.eq.s32.totalorder %s15, 0
    %p98 = por %p96, %p97
    %p99 = scmp.ne.s32.totalorder %s91, %s93
    %p100 = scmp.eq.s32.totalorder %s20, 1
    %p101 = por %p99, %p100
    %p102 = scmp.ne.s32.totalorder %s93, %s94
    %p103 = scmp.eq.s32.totalorder %s20, 0
    %p104 = por %p102, %p103
    %p105 = scmp.ne.s32.totalorder %s93, %s94
    %p106 = scmp.eq.s32.totalorder %s21, 1
    %p107 = por %p105, %p106
    %p109 = scmp.ne.s32.totalorder %s94, %s108
    %p110 = scmp.eq.s32.totalorder %s21, 0
    %p111 = por %p109, %p110
    %s113 = sadd.s32 %s112, 1
    %p116 = scmp.eq.s32.totalorder %s15, 1
    %p117 = scmp.ne.s32.totalorder %s112, %s114
    %p118 = scmp.eq.s32.totalorder %s15, 0
    %p119 = por %p117, %p118
    %p120 = scmp.ne.s32.totalorder %s112, %s114
    %p121 = scmp.eq.s32.totalorder %s20, 1
    %p122 = por %p120, %p121
    %p123 = scmp.ne.s32.totalorder %s114, %s115
    %p124 = scmp.eq.s32.totalorder %s20, 0
    %p125 = por %p123, %p124
    %p126 = scmp.ne.s32.totalorder %s114, %s115
    %p127 = scmp.eq.s32.totalorder %s21, 1
    %p128 = por %p126, %p127
    %p130 = scmp.ne.s32.totalorder %s115, %s129
    %p131 = scmp.eq.s32.totalorder %s21, 0
    %p132 = por %p130, %p131
    %s134 = sadd.s32 %s133, 1
    %p137 = scmp.eq.s32.totalorder %s15, 1
    %p138 = scmp.ne.s32.totalorder %s133, %s135
    %p139 = scmp.eq.s32.totalorder %s15, 0
    %p140 = por %p138, %p139
    %p141 = scmp.ne.s32.totalorder %s133, %s135
    %p142 = scmp.eq.s32.totalorder %s20, 1
    %p143 = por %p141, %p142
    %p144 = scmp.ne.s32.totalorder %s135, %s136
    %p145 = scmp.eq.s32.totalorder %s20, 0
    %p146 = por %p144, %p145
    %p147 = scmp.ne.s32.totalorder %s135, %s136
    %p148 = scmp.eq.s32.totalorder %s21, 1
    %p149 = por %p147, %p148
    %p151 = scmp.ne.s32.totalorder %s136, %s150
    %p152 = scmp.eq.s32.totalorder %s21, 0
    %p153 = por %p151, %p152
    %s155 = sadd.s32 %s154, 1
    %p158 = scmp.eq.s32.totalorder %s15, 1
    %p159 = scmp.ne.s32.totalorder %s154, %s156
    %p160 = scmp.eq.s32.totalorder %s15, 0
    %p161 = por %p159, %p160
    %p162 = scmp.ne.s32.totalorder %s154, %s156
    %p163 = scmp.eq.s32.totalorder %s20, 1
    %p164 = por %p162, %p163
    %p165 = scmp.ne.s32.totalorder %s156, %s157
    %p166 = scmp.eq.s32.totalorder %s20, 0
    %p167 = por %p165, %p166
    %p168 = scmp.ne.s32.totalorder %s156, %s157
    %p169 = scmp.eq.s32.totalorder %s21, 1
    %p170 = por %p168, %p169
    %p172 = scmp.ne.s32.totalorder %s157, %s171
    %p173 = scmp.eq.s32.totalorder %s21, 0
    %p174 = por %p172, %p173
    %s176 = sadd.s32 %s175, 1
    %p179 = scmp.eq.s32.totalorder %s15, 1
    %p180 = scmp.ne.s32.totalorder %s175, %s177
    %p181 = scmp.eq.s32.totalorder %s15, 0
    %p182 = por %p180, %p181
    %p183 = scmp.ne.s32.totalorder %s175, %s177
    %p184 = scmp.eq.s32.totalorder %s20, 1
    %p185 = por %p183, %p184
    %p186 = scmp.ne.s32.totalorder %s177, %s178
    %p187 = scmp.eq.s32.totalorder %s20, 0
    %p188 = por %p186, %p187
    %p189 = scmp.ne.s32.totalorder %s177, %s178
    %p190 = scmp.eq.s32.totalorder %s21, 1
    %p191 = por %p189, %p190
    %p193 = scmp.ne.s32.totalorder %s178, %s192
    %p194 = scmp.eq.s32.totalorder %s21, 0
    %p195 = por %p193, %p194
    %s197 = sadd.s32 %s196, 1
    %p200 = scmp.eq.s32.totalorder %s15, 1
    %p201 = scmp.ne.s32.totalorder %s196, %s198
    %p202 = scmp.eq.s32.totalorder %s15, 0
    %p203 = por %p201, %p202
    %p204 = scmp.ne.s32.totalorder %s196, %s198
    %p205 = scmp.eq.s32.totalorder %s20, 1
    %p206 = por %p204, %p205
    %p207 = scmp.ne.s32.totalorder %s198, %s199
    %p208 = scmp.eq.s32.totalorder %s20, 0
    %p209 = por %p207, %p208
    %p210 = scmp.ne.s32.totalorder %s198, %s199
    %p211 = scmp.eq.s32.totalorder %s21, 1
    %p212 = por %p210, %p211
    %p214 = scmp.ne.s32.totalorder %s199, %s213
    %p215 = scmp.eq.s32.totalorder %s21, 0
    %p216 = por %p214, %p215
    %s217 = ssub.s32 %s15, %s22
    %p218 = scmp.eq.s32.totalorder %s217, 0
    %s220 = sadd.s32 %s219, 1
    %s221 = scalar_select %p218, %s219, %s220
    %p224 = pneg %p218
    %p225 = scmp.eq.s32.totalorder %s15, 1
    %p226 = por %p224, %p225
    %p227 = scmp.ne.s32.totalorder %s219, %s222
    %p228 = scmp.eq.s32.totalorder %s15, 0
    %p229 = por %p227, %p228
    %p230 = scmp.ne.s32.totalorder %s219, %s222
    %p231 = scmp.eq.s32.totalorder %s20, 1
    %p232 = por %p230, %p231
    %p233 = scmp.ne.s32.totalorder %s222, %s223
    %p234 = scmp.eq.s32.totalorder %s20, 0
    %p235 = por %p233, %p234
    %p236 = scmp.ne.s32.totalorder %s222, %s223
    %p237 = scmp.eq.s32.totalorder %s21, 1
    %p238 = por %p236, %p237
    %p240 = scmp.ne.s32.totalorder %s223, %s239
    %p241 = scmp.eq.s32.totalorder %s21, 0
    %p242 = por %p240, %p241
    %p243 = scmp.le.s32.totalorder 1, %s15
    %p244 = scmp.lt.s32.totalorder %s15, 3
    %p245 = pnand %p243, %p244
    %p246 = pneg %p245
    // Predicated region
    $region9: #{_lambda_.1} parent=5 // pred_check
      _
    $region10: #{_lambda_.1} parent=5 // pred_check_branch
      %248 = sbr.rel (%p245) target = $region12
    $region11: #{_lambda_.1} parent=5 // pred_region
      %s249 = ssub.s32 %s15, 1
      // Predicated region
      $region13: #{_lambda_.1} parent=11 // pred_check
        %p250 = pneg %p62
      $region14: #{_lambda_.1} parent=11 // pred_check_branch
        %252 = sbr.rel (%p250) target = $region16
      $region15: #{_lambda_.1} parent=11 // pred_region
        _
      $region16: #{_lambda_.1} parent=11 // pred_fallthru
        _
      // Predicated region
      $region17: #{_lambda_.1} parent=11 // pred_check
        %p253 = pneg %p83
      $region18: #{_lambda_.1} parent=11 // pred_check_branch
        %255 = sbr.rel (%p253) target = $region20
      $region19: #{_lambda_.1} parent=11 // pred_region
        _
      $region20: #{_lambda_.1} parent=11 // pred_fallthru
        _
      // Predicated region
      $region21: #{_lambda_.1} parent=11 // pred_check
        %p256 = pneg %p104
      $region22: #{_lambda_.1} parent=11 // pred_check_branch
        %258 = sbr.rel (%p256) target = $region24
      $region23: #{_lambda_.1} parent=11 // pred_region
        _
      $region24: #{_lambda_.1} parent=11 // pred_fallthru
        _
      // Predicated region
      $region25: #{_lambda_.1} parent=11 // pred_check
        %p259 = pneg %p125
      $region26: #{_lambda_.1} parent=11 // pred_check_branch
        %261 = sbr.rel (%p259) target = $region28
      $region27: #{_lambda_.1} parent=11 // pred_region
        _
      $region28: #{_lambda_.1} parent=11 // pred_fallthru
        _
      // Predicated region
      $region29: #{_lambda_.1} parent=11 // pred_check
        %p262 = pneg %p146
      $region30: #{_lambda_.1} parent=11 // pred_check_branch
        %264 = sbr.rel (%p262) target = $region32
      $region31: #{_lambda_.1} parent=11 // pred_region
        _
      $region32: #{_lambda_.1} parent=11 // pred_fallthru
        _
      // Predicated region
      $region33: #{_lambda_.1} parent=11 // pred_check
        %p265 = pneg %p167
      $region34: #{_lambda_.1} parent=11 // pred_check_branch
        %267 = sbr.rel (%p265) target = $region36
      $region35: #{_lambda_.1} parent=11 // pred_region
        _
      $region36: #{_lambda_.1} parent=11 // pred_fallthru
        _
      // Predicated region
      $region37: #{_lambda_.1} parent=11 // pred_check
        %p268 = pneg %p188
      $region38: #{_lambda_.1} parent=11 // pred_check_branch
        %270 = sbr.rel (%p268) target = $region40
      $region39: #{_lambda_.1} parent=11 // pred_region
        _
      $region40: #{_lambda_.1} parent=11 // pred_fallthru
        _
      // Predicated region
      $region41: #{_lambda_.1} parent=11 // pred_check
        %p271 = pneg %p209
      $region42: #{_lambda_.1} parent=11 // pred_check_branch
        %273 = sbr.rel (%p271) target = $region44
      $region43: #{_lambda_.1} parent=11 // pred_region
        _
      $region44: #{_lambda_.1} parent=11 // pred_fallthru
        _
    $region12: #{_lambda_.1} parent=5 // pred_fallthru
      _
    %p274 = scmp.lt.s32.totalorder %s15, 2
    // Predicated region
    $region45: #{_lambda_.1} parent=5 // pred_check
      %p275 = pneg %p274
    $region46: #{_lambda_.1} parent=5 // pred_check_branch
      %277 = sbr.rel (%p275) target = $region48
    $region47: #{_lambda_.1} parent=5 // pred_region
      // Predicated region
      $region49: #{_lambda_.1} parent=47 // pred_check
        %p278 = pneg %p35
      $region50: #{_lambda_.1} parent=47 // pred_check_branch
        %280 = sbr.rel (%p278) target = $region52
      $region51: #{_lambda_.1} parent=47 // pred_region
        %p281 = scmp.lt.s32.totalorder %s15, 1
        %s282 = scalar_select %p281, %s15, 1
        %s283 = smul.addr %s282, 4
        %s284 = smul.addr %s283, 8
        %s285 = scalar_lea.vmem %s0, %s284
      $region52: #{_lambda_.1} parent=47 // pred_fallthru
        _
    $region48: #{_lambda_.1} parent=5 // pred_fallthru
      _
    %p286 = scmp.le.s32.totalorder 1, %s15
    %p287 = scmp.lt.s32.totalorder %s15, 3
    %p288 = pnand %p286, %p287
    %p289 = pneg %p288
    // Predicated region
    $region53: #{_lambda_.1} parent=5 // pred_check
      _
    $region54: #{_lambda_.1} parent=5 // pred_check_branch
      %291 = sbr.rel (%p288) target = $region56
    $region55: #{_lambda_.1} parent=5 // pred_region
      %s292 = ssub.s32 %s15, 1
      %p293 = scmp.lt.s32.totalorder %s20, 1
      %s294 = scalar_select %p293, %s20, 1
      %s295 = smul.addr %s294, 4
      %s296 = smul.addr %s295, 8
      %s297 = scalar_lea.vmem %s0, %s296
      %p298 = pneg %p41
      %p299 = pneg %p38
      %p300 = pneg %p62
      %p301 = pneg %p59
      %p302 = pneg %p83
      %p303 = pneg %p80
      %p304 = pneg %p104
      %p305 = pneg %p101
      %p306 = pneg %p125
      %p307 = pneg %p122
      %p308 = pneg %p146
      %p309 = pneg %p143
      %p310 = pneg %p167
      %p311 = pneg %p164
      %p312 = pneg %p188
      %p313 = pneg %p185
      %p314 = pneg %p209
      %p315 = pneg %p206
      %p316 = pneg %p235
      %p317 = pneg %p232
      %p318 = scmp.lt.s32.totalorder %s20, 1
      %s319 = scalar_select %p318, %s20, 1
      %s320 = smul.addr %s319, 4
      %s321 = scalar_lea.vmem %s9, %s320
      %p322 = scmp.lt.s32.totalorder %s20, 1
      %s323 = scalar_select %p322, %s20, 1
      %s324 = smul.addr %s323, 4
      %s325 = smul.addr %s324, 8
      %s326 = scalar_lea.vmem %s0, %s325
      %p327 = scmp.lt.s32.totalorder %s20, 1
      %s328 = scalar_select %p327, %s20, 1
      %s329 = smul.addr %s328, 4
      %s330 = scalar_lea.vmem %s9, %s329
      %v331 = vld [vmem:[%s326] sm:$0xff]
      %v332 = vld [vmem:[%s326 + $0x8] sm:$0xff]
      %v333 = vld [vmem:[%s326 + $0x10] sm:$0xff]
      %v334 = vld [vmem:[%s326 + $0x18] sm:$0xff]
      %vm335 = vcmask 31744
      %336 = vst.msk [vmem:[#allocation2] sm:$0xff] %vm335, 0.0
      %337 = vst.msk [vmem:[#allocation2 + $0x8] sm:$0xff] %vm335, %v331
      %338 = vst.msk [vmem:[#allocation2 + $0x10] sm:$0xff] %vm335, %v332
      %339 = vst.msk [vmem:[#allocation2 + $0x18] sm:$0xff] %vm335, %v333
      %340 = vst.msk [vmem:[#allocation2 + $0x20] sm:$0xff] %vm335, %v334
      %vm341 = vcmask 60448
      %342 = vst.msk [vmem:[#allocation2] sm:$0xf] %vm341, 0.0
      %343 = vst.msk [vmem:[#allocation2 + $0x24] sm:$0xf] %vm341, 0.0
      %348 = vrot.lane.b32.xlu0 %v331, 4
      %v349 = vpop.permute.xlu0 %348
      %350 = vrot.lane.b32.xlu0 %v332, 4
      %v351 = vpop.permute.xlu0 %350
      %352 = vrot.lane.b32.xlu0 %v333, 4
      %v353 = vpop.permute.xlu0 %352
      %354 = vrot.lane.b32.xlu0 %v334, 4
      %v355 = vpop.permute.xlu0 %354
      %vm360 = vcmask 64544
      %361 = vst.msk [vmem:[#allocation2 + $0x4] sm:$0xff] %vm360, %v349
      %362 = vst.msk [vmem:[#allocation2 + $0xc] sm:$0xff] %vm360, %v351
      %363 = vst.msk [vmem:[#allocation2 + $0x14] sm:$0xff] %vm360, %v353
      %364 = vst.msk [vmem:[#allocation2 + $0x1c] sm:$0xff] %vm360, %v355
      %vm365 = vcmask 97344
      %366 = vst.msk [vmem:[#allocation2 + $0x20] sm:$0xff] %vm365, 0.0
      %367 = vrot.lane.b32.xlu0 %v331, 8
      %v368 = vpop.permute.xlu0 %367
      %369 = vrot.lane.b32.xlu0 %v332, 8
      %v370 = vpop.permute.xlu0 %369
      %371 = vrot.lane.b32.xlu0 %v333, 8
      %v372 = vpop.permute.xlu0 %371
      %373 = vrot.lane.b32.xlu0 %v334, 8
      %v374 = vpop.permute.xlu0 %373
      %379 = vst.msk [vmem:[#allocation2] sm:$0xff] %vm365, %v368
      %380 = vst.msk [vmem:[#allocation2 + $0x8] sm:$0xff] %vm365, %v370
      %381 = vst.msk [vmem:[#allocation2 + $0x10] sm:$0xff] %vm365, %v372
      %382 = vst.msk [vmem:[#allocation2 + $0x18] sm:$0xff] %vm365, %v374
      %v383 = vld [vmem:[#allocation2] sm:$0xff]
      %v384 = vld [vmem:[#allocation2 + $0x8] sm:$0xff]
      %v385 = vld [vmem:[#allocation2 + $0x10] sm:$0xff]
      %v386 = vld [vmem:[#allocation2 + $0x18] sm:$0xff]
      %v387 = vld [vmem:[#allocation2 + $0x20] sm:$0xff]
      %v388 = vld [vmem:[%s1] sm:$0xff]
      %v389 = vld [vmem:[%s1 + $0x8] sm:$0xf]
      %v390 = vld [vmem:[%s2] sm:$0x1]
      %v392 = vlaneseq
      %v393 = vshrl.u32 %v392, 7
      %v394 = vsub.s32 0, %v393
      %v395 = vrot.slane %v390, %v394
      %vm397 = vcmask 97280
      %v399 = vsel %vm397, %v383, 0
      %v402 = vsel %vm397, %v384, 0
      %v405 = vsel %vm397, %v385, 0
      %v408 = vsel %vm397, %v386, 0
      %v411 = vsel %vm397, %v387, 0
      %vm413 = vcmask 1043456
      %v415 = vsel %vm413, %v389, 0
      %417 = vmatprep.subr.mxu0 0.0
      %418 = vmatpush1.msra.mxu0 %v388
      %419 = vmatprep.subr.mxu0 0.0
      %420 = vmatpush1.msra.mxu0 %v415
      %421 = vmatprep.subr.mxu0 0.0
      %422 = vmatpush1.msra.mxu0 0.0
      %423 = vmatprep.subr.mxu0 0.0
      %424 = vmatpush1.msra.mxu0 0.0
      %425 = vmatprep.subr.mxu0 0.0
      %426 = vmatpush1.msra.mxu0 0.0
      %427 = vmatprep.subr.mxu0 0.0
      %428 = vmatpush1.msra.mxu0 0.0
      %429 = vmatprep.subr.mxu0 0.0
      %430 = vmatpush1.msra.mxu0 0.0
      %431 = vmatprep.subr.mxu0 0.0
      %432 = vmatpush1.msra.mxu0 0.0
      %433 = vmatprep.subr.mxu0 0.0
      %434 = vmatpush1.msra.mxu0 0.0
      %435 = vmatprep.subr.mxu0 0.0
      %436 = vmatpush1.msra.mxu0 0.0
      %437 = vmatprep.subr.mxu0 0.0
      %438 = vmatpush1.msra.mxu0 0.0
      %439 = vmatprep.subr.mxu0 0.0
      %440 = vmatpush1.msra.mxu0 0.0
      %441 = vmatprep.subr.mxu0 0.0
      %442 = vmatpush1.msra.mxu0 0.0
      %443 = vmatprep.subr.mxu0 0.0
      %444 = vmatpush1.msra.mxu0 0.0
      %445 = vmatprep.subr.mxu0 0.0
      %446 = vmatpush1.msra.mxu0 0.0
      %447 = vmatprep.subr.mxu0 0.0
      %448 = vmatpush1.msra.mxu0 0.0
      %449 = vmatprep.subr.mxu0 0.0
      %450 = vmatpush1.msra.mxu0 0.0
      %451 = vmatprep.subr.mxu0 0.0
      %452 = vmatpush1.msra.mxu0 0.0
      %453 = vmatprep.subr.mxu0 0.0
      %454 = vmatpush1.msra.mxu0 0.0
      %455 = vmatprep.subr.mxu0 0.0
      %456 = vmatpush1.msra.mxu0 0.0
      %457 = vmatprep.subr.mxu0 0.0
      %458 = vmatpush1.msra.mxu0 0.0
      %459 = vmatprep.subr.mxu0 0.0
      %460 = vmatpush1.msra.mxu0 0.0
      %461 = vmatprep.subr.mxu0 0.0
      %462 = vmatpush1.msra.mxu0 0.0
      %463 = vmatprep.subr.mxu0 0.0
      %464 = vmatpush1.msra.mxu0 0.0
      %465 = vmatprep.subr.mxu0 0.0
      %466 = vmatpush1.msra.mxu0 0.0
      %467 = vmatprep.subr.mxu0 0.0
      %468 = vmatpush1.msra.mxu0 0.0
      %469 = vmatprep.subr.mxu0 0.0
      %470 = vmatpush1.msra.mxu0 0.0
      %471 = vmatprep.subr.mxu0 0.0
      %472 = vmatpush1.msra.mxu0 0.0
      %473 = vmatprep.subr.mxu0 0.0
      %474 = vmatpush1.msra.mxu0 0.0
      %475 = vmatprep.subr.mxu0 0.0
      %476 = vmatpush1.msra.mxu0 0.0
      %477 = vmatprep.subr.mxu0 0.0
      %478 = vmatpush1.msra.mxu0 0.0
      %479 = vmatprep.subr.mxu0 0.0
      %480 = vmatpush1.msra.mxu0 0.0
      %481 = vmatprep.mubr.f32.mxu0 0.0
      %482 = vmatmul.mubr.f32.gmra.mrb[0].mxu0 %v399
      %v483 = vpop.f32.mrb[0].mxu0
      %v484 = vadd.f32 %v395, %v483
      %v485 = vpop.f32.mrb[0].mxu0
      %486 = vmatprep.mubr.f32.mxu0 0.0
      %487 = vmatmul.mubr.f32.gmra.mrb[0].mxu0 %v402
      %v488 = vpop.f32.mrb[0].mxu0
      %v489 = vadd.f32 %v395, %v488
      %v490 = vpop.f32.mrb[0].mxu0
      %491 = vmatprep.mubr.f32.mxu0 0.0
      %492 = vmatmul.mubr.f32.gmra.mrb[0].mxu0 %v405
      %v493 = vpop.f32.mrb[0].mxu0
      %v494 = vadd.f32 %v395, %v493
      %v495 = vpop.f32.mrb[0].mxu0
      %496 = vmatprep.mubr.f32.mxu0 0.0
      %497 = vmatmul.mubr.f32.gmra.mrb[0].mxu0 %v408
      %v498 = vpop.f32.mrb[0].mxu0
      %v499 = vadd.f32 %v395, %v498
      %v500 = vpop.f32.mrb[0].mxu0
      %501 = vmatprep.mubr.f32.mxu0 0.0
      %502 = vmatmul.mubr.f32.gmra.mrb[0].mxu0 %v411
      %v503 = vpop.f32.mrb[0].mxu0
      %v504 = vadd.f32 %v395, %v503
      %v505 = vpop.f32.mrb[0].mxu0
      %506 = vdwg.mxu0
      %v507 = vmax.f32 %v484, 0.0
      %v508 = vmax.f32 %v489, 0.0
      %v509 = vmax.f32 %v494, 0.0
      %v510 = vmax.f32 %v499, 0.0
      %v511 = vmax.f32 %v504, 0.0
      %vm512 = vcmask 261120
      %513 = vst.msk [vmem:[#allocation3] sm:$0xff] %vm512, 0.0
      %514 = vst.msk [vmem:[#allocation3 + $0x8] sm:$0xff] %vm512, 0.0
      %515 = vst.msk [vmem:[#allocation3 + $0x10] sm:$0xff] %vm512, %v507
      %516 = vst.msk [vmem:[#allocation3 + $0x18] sm:$0xff] %vm512, %v508
      %517 = vst.msk [vmem:[#allocation3 + $0x20] sm:$0xff] %vm512, %v509
      %518 = vst.msk [vmem:[#allocation3 + $0x28] sm:$0xff] %vm512, %v510
      %519 = vst.msk [vmem:[#allocation3 + $0x30] sm:$0xff] %vm512, %v511
      %vm520 = vcmask 523520
      %521 = vst.msk [vmem:[#allocation3] sm:$0xff] %vm520, 0.0
      %522 = vst.msk [vmem:[#allocation3 + $0x30] sm:$0xff] %vm520, 0.0
      %528 = vrot.lane.b32.xlu0 %v507, 32
      %v529 = vpop.permute.xlu0 %528
      %530 = vrot.lane.b32.xlu0 %v508, 32
      %v531 = vpop.permute.xlu0 %530
      %532 = vrot.lane.b32.xlu0 %v509, 32
      %v533 = vpop.permute.xlu0 %532
      %534 = vrot.lane.b32.xlu0 %v510, 32
      %v535 = vpop.permute.xlu0 %534
      %536 = vrot.lane.b32.xlu0 %v511, 32
      %v537 = vpop.permute.xlu0 %536
      %543 = vst.msk [vmem:[#allocation3 + $0x8] sm:$0xff] %vm520, %v529
      %544 = vst.msk [vmem:[#allocation3 + $0x10] sm:$0xff] %vm520, %v531
      %545 = vst.msk [vmem:[#allocation3 + $0x18] sm:$0xff] %vm520, %v533
      %546 = vst.msk [vmem:[#allocation3 + $0x20] sm:$0xff] %vm520, %v535
      %547 = vst.msk [vmem:[#allocation3 + $0x28] sm:$0xff] %vm520, %v537
      %vm548 = vcmask 785920
      %549 = vst.msk [vmem:[#allocation3 + $0x28] sm:$0xff] %vm548, 0.0
      %550 = vst.msk [vmem:[#allocation3 + $0x30] sm:$0xff] %vm548, 0.0
      %551 = vrot.lane.b32.xlu0 %v507, 64
      %v552 = vpop.permute.xlu0 %551
      %553 = vrot.lane.b32.xlu0 %v508, 64
      %v554 = vpop.permute.xlu0 %553
      %555 = vrot.lane.b32.xlu0 %v509, 64
      %v556 = vpop.permute.xlu0 %555
      %557 = vrot.lane.b32.xlu0 %v510, 64
      %v558 = vpop.permute.xlu0 %557
      %559 = vrot.lane.b32.xlu0 %v511, 64
      %v560 = vpop.permute.xlu0 %559
      %566 = vst.msk [vmem:[#allocation3] sm:$0xff] %vm548, %v552
      %567 = vst.msk [vmem:[#allocation3 + $0x8] sm:$0xff] %vm548, %v554
      %568 = vst.msk [vmem:[#allocation3 + $0x10] sm:$0xff] %vm548, %v556
      %569 = vst.msk [vmem:[#allocation3 + $0x18] sm:$0xff] %vm548, %v558
      %570 = vst.msk [vmem:[#allocation3 + $0x20] sm:$0xff] %vm548, %v560
      %v571 = vld [vmem:[#allocation3] sm:$0xff]
      %v572 = vld [vmem:[#allocation3 + $0x8] sm:$0xff]
      %v573 = vld [vmem:[#allocation3 + $0x10] sm:$0xff]
      %v574 = vld [vmem:[#allocation3 + $0x18] sm:$0xff]
      %v575 = vld [vmem:[#allocation3 + $0x20] sm:$0xff]
      %v576 = vld [vmem:[#allocation3 + $0x28] sm:$0xff]
      %v577 = vld [vmem:[#allocation3 + $0x30] sm:$0xff]
      %v578 = vld [vmem:[%s3] sm:$0xff]
      %v579 = vld [vmem:[%s3 + $0x8] sm:$0xff]
      %v580 = vld [vmem:[%s3 + $0x10] sm:$0xff]
      %v581 = vld [vmem:[%s3 + $0x18] sm:$0xff]
      %v582 = vld [vmem:[%s3 + $0x20] sm:$0xff]
      %v583 = vld [vmem:[%s3 + $0x28] sm:$0xff]
      %v584 = vld [vmem:[%s3 + $0x30] sm:$0xff]
      %v585 = vld [vmem:[%s3 + $0x38] sm:$0xff]
      %v586 = vld [vmem:[%s3 + $0x40] sm:$0xff]
      %v587 = vld [vmem:[%s3 + $0x48] sm:$0xff]
      %v588 = vld [vmem:[%s3 + $0x50] sm:$0xff]
      %v589 = vld [vmem:[%s3 + $0x58] sm:$0xff]
      %v590 = vld [vmem:[%s4] sm:$0x1]
      %v592 = vlaneseq
      %v593 = vshrl.u32 %v592, 7
      %v594 = vsub.s32 0, %v593
      %v595 = vrot.slane %v590, %v594
      %vm597 = vcmask 785408
      %v599 = vsel %vm597, %v571, 0
      %v602 = vsel %vm597, %v572, 0
      %v605 = vsel %vm597, %v573, 0
      %v608 = vsel %vm597, %v574, 0
      %v611 = vsel %vm597, %v575, 0
      %v614 = vsel %vm597, %v576, 0
      %v617 = vsel %vm597, %v577, 0
      %619 = vmatprep.subr.mxu0 0.0
      %620 = vmatpush1.msra.mxu0 %v578
      %621 = vmatprep.subr.mxu0 0.0
      %622 = vmatpush1.msra.mxu0 %v579
      %623 = vmatprep.subr.mxu0 0.0
      %624 = vmatpush1.msra.mxu0 %v580
      %625 = vmatprep.subr.mxu0 0.0
      %626 = vmatpush1.msra.mxu0 %v581
      %627 = vmatprep.subr.mxu0 0.0
      %628 = vmatpush1.msra.mxu0 %v582
      %629 = vmatprep.subr.mxu0 0.0
      %630 = vmatpush1.msra.mxu0 %v583
      %631 = vmatprep.subr.mxu0 0.0
      %632 = vmatpush1.msra.mxu0 %v584
      %633 = vmatprep.subr.mxu0 0.0
      %634 = vmatpush1.msra.mxu0 %v585
      %635 = vmatprep.subr.mxu0 0.0
      %636 = vmatpush1.msra.mxu0 %v586
      %637 = vmatprep.subr.mxu0 0.0
      %638 = vmatpush1.msra.mxu0 %v587
      %639 = vmatprep.subr.mxu0 0.0
      %640 = vmatpush1.msra.mxu0 %v588
      %641 = vmatprep.subr.mxu0 0.0
      %642 = vmatpush1.msra.mxu0 %v589
      %643 = vmatprep.subr.mxu0 0.0
      %644 = vmatpush1.msra.mxu0 0.0
      %645 = vmatprep.subr.mxu0 0.0
      %646 = vmatpush1.msra.mxu0 0.0
      %647 = vmatprep.subr.mxu0 0.0
      %648 = vmatpush1.msra.mxu0 0.0
      %649 = vmatprep.subr.mxu0 0.0
      %650 = vmatpush1.msra.mxu0 0.0
      %651 = vmatprep.subr.mxu0 0.0
      %652 = vmatpush1.msra.mxu0 0.0
      %653 = vmatprep.subr.mxu0 0.0
      %654 = vmatpush1.msra.mxu0 0.0
      %655 = vmatprep.subr.mxu0 0.0
      %656 = vmatpush1.msra.mxu0 0.0
      %657 = vmatprep.subr.mxu0 0.0
      %658 = vmatpush1.msra.mxu0 0.0
      %659 = vmatprep.subr.mxu0 0.0
      %660 = vmatpush1.msra.mxu0 0.0
      %661 = vmatprep.subr.mxu0 0.0
      %662 = vmatpush1.msra.mxu0 0.0
      %663 = vmatprep.subr.mxu0 0.0
      %664 = vmatpush1.msra.mxu0 0.0
      %665 = vmatprep.subr.mxu0 0.0
      %666 = vmatpush1.msra.mxu0 0.0
      %667 = vmatprep.subr.mxu0 0.0
      %668 = vmatpush1.msra.mxu0 0.0
      %669 = vmatprep.subr.mxu0 0.0
      %670 = vmatpush1.msra.mxu0 0.0
      %671 = vmatprep.subr.mxu0 0.0
      %672 = vmatpush1.msra.mxu0 0.0
      %673 = vmatprep.subr.mxu0 0.0
      %674 = vmatpush1.msra.mxu0 0.0
      %675 = vmatprep.subr.mxu0 0.0
      %676 = vmatpush1.msra.mxu0 0.0
      %677 = vmatprep.subr.mxu0 0.0
      %678 = vmatpush1.msra.mxu0 0.0
      %679 = vmatprep.subr.mxu0 0.0
      %680 = vmatpush1.msra.mxu0 0.0
      %681 = vmatprep.subr.mxu0 0.0
      %682 = vmatpush1.msra.mxu0 0.0
      %683 = vmatprep.mubr.f32.mxu0 0.0
      %684 = vmatmul.mubr.f32.gmra.mrb[0].mxu0 %v599
      %v685 = vpop.f32.mrb[0].mxu0
      %v686 = vadd.f32 %v595, %v685
      %v687 = vpop.f32.mrb[0].mxu0
      %688 = vmatprep.mubr.f32.mxu0 0.0
      %689 = vmatmul.mubr.f32.gmra.mrb[0].mxu0 %v602
      %v690 = vpop.f32.mrb[0].mxu0
      %v691 = vadd.f32 %v595, %v690
      %v692 = vpop.f32.mrb[0].mxu0
      %693 = vmatprep.mubr.f32.mxu0 0.0
      %694 = vmatmul.mubr.f32.gmra.mrb[0].mxu0 %v605
      %v695 = vpop.f32.mrb[0].mxu0
      %v696 = vadd.f32 %v595, %v695
      %v697 = vpop.f32.mrb[0].mxu0
      %698 = vmatprep.mubr.f32.mxu0 0.0
      %699 = vmatmul.mubr.f32.gmra.mrb[0].mxu0 %v608
      %v700 = vpop.f32.mrb[0].mxu0
      %v701 = vadd.f32 %v595, %v700
      %v702 = vpop.f32.mrb[0].mxu0
      %703 = vmatprep.mubr.f32.mxu0 0.0
      %704 = vmatmul.mubr.f32.gmra.mrb[0].mxu0 %v611
      %v705 = vpop.f32.mrb[0].mxu0
      %v706 = vadd.f32 %v595, %v705
      %v707 = vpop.f32.mrb[0].mxu0
      %708 = vmatprep.mubr.f32.mxu0 0.0
      %709 = vmatmul.mubr.f32.gmra.mrb[0].mxu0 %v614
      %v710 = vpop.f32.mrb[0].mxu0
      %v711 = vadd.f32 %v595, %v710
      %v712 = vpop.f32.mrb[0].mxu0
      %713 = vmatprep.mubr.f32.mxu0 0.0
      %714 = vmatmul.mubr.f32.gmra.mrb[0].mxu0 %v617
      %v715 = vpop.f32.mrb[0].mxu0
      %v716 = vadd.f32 %v595, %v715
      %v717 = vpop.f32.mrb[0].mxu0
      %718 = vdwg.mxu0
      %v719 = vmax.f32 %v686, 0.0
      %v720 = vmax.f32 %v691, 0.0
      %v721 = vmax.f32 %v696, 0.0
      %v722 = vmax.f32 %v701, 0.0
      %v723 = vmax.f32 %v706, 0.0
      %v724 = vmax.f32 %v711, 0.0
      %v725 = vmax.f32 %v716, 0.0
      %726 = vst.msk [vmem:[#allocation4] sm:$0xff] %vm512, 0.0
      %727 = vst.msk [vmem:[#allocation4 + $0x8] sm:$0xff] %vm512, 0.0
      %728 = vst.msk [vmem:[#allocation4 + $0x10] sm:$0xff] %vm512, 0.0
      %729 = vst.msk [vmem:[#allocation4 + $0x18] sm:$0xff] %vm512, 0.0
      %730 = vst.msk [vmem:[#allocation4 + $0x20] sm:$0xff] %vm512, %v719
      %731 = vst.msk [vmem:[#allocation4 + $0x28] sm:$0xff] %vm512, %v720
      %732 = vst.msk [vmem:[#allocation4 + $0x30] sm:$0xff] %vm512, %v721
      %733 = vst.msk [vmem:[#allocation4 + $0x38] sm:$0xff] %vm512, %v722
      %734 = vst.msk [vmem:[#allocation4 + $0x40] sm:$0xff] %vm512, %v723
      %735 = vst.msk [vmem:[#allocation4 + $0x48] sm:$0xff] %vm512, %v724
      %736 = vst.msk [vmem:[#allocation4 + $0x50] sm:$0xff] %vm512, %v725
      %737 = vst.msk [vmem:[#allocation4] sm:$0xff] %vm520, 0.0
      %738 = vst.msk [vmem:[#allocation4 + $0x8] sm:$0xff] %vm520, 0.0
      %739 = vst.msk [vmem:[#allocation4 + $0x48] sm:$0xff] %vm520, 0.0
      %740 = vst.msk [vmem:[#allocation4 + $0x50] sm:$0xff] %vm520, 0.0
      %748 = vrot.lane.b32.xlu0 %v719, 32
      %v749 = vpop.permute.xlu0 %748
      %750 = vrot.lane.b32.xlu0 %v720, 32
      %v751 = vpop.permute.xlu0 %750
      %752 = vrot.lane.b32.xlu0 %v721, 32
      %v753 = vpop.permute.xlu0 %752
      %754 = vrot.lane.b32.xlu0 %v722, 32
      %v755 = vpop.permute.xlu0 %754
      %756 = vrot.lane.b32.xlu0 %v723, 32
      %v757 = vpop.permute.xlu0 %756
      %758 = vrot.lane.b32.xlu0 %v724, 32
      %v759 = vpop.permute.xlu0 %758
      %760 = vrot.lane.b32.xlu0 %v725, 32
      %v761 = vpop.permute.xlu0 %760
      %769 = vst.msk [vmem:[#allocation4 + $0x10] sm:$0xff] %vm520, %v749
      %770 = vst.msk [vmem:[#allocation4 + $0x18] sm:$0xff] %vm520, %v751
      %771 = vst.msk [vmem:[#allocation4 + $0x20] sm:$0xff] %vm520, %v753
      %772 = vst.msk [vmem:[#allocation4 + $0x28] sm:$0xff] %vm520, %v755
      %773 = vst.msk [vmem:[#allocation4 + $0x30] sm:$0xff] %vm520, %v757
      %774 = vst.msk [vmem:[#allocation4 + $0x38] sm:$0xff] %vm520, %v759
      %775 = vst.msk [vmem:[#allocation4 + $0x40] sm:$0xff] %vm520, %v761
      %776 = vst.msk [vmem:[#allocation4 + $0x38] sm:$0xff] %vm548, 0.0
      %777 = vst.msk [vmem:[#allocation4 + $0x40] sm:$0xff] %vm548, 0.0
      %778 = vst.msk [vmem:[#allocation4 + $0x48] sm:$0xff] %vm548, 0.0
      %779 = vst.msk [vmem:[#allocation4 + $0x50] sm:$0xff] %vm548, 0.0
      %780 = vrot.lane.b32.xlu0 %v719, 64
      %v781 = vpop.permute.xlu0 %780
      %782 = vrot.lane.b32.xlu0 %v720, 64
      %v783 = vpop.permute.xlu0 %782
      %784 = vrot.lane.b32.xlu0 %v721, 64
      %v785 = vpop.permute.xlu0 %784
      %786 = vrot.lane.b32.xlu0 %v722, 64
      %v787 = vpop.permute.xlu0 %786
      %788 = vrot.lane.b32.xlu0 %v723, 64
      %v789 = vpop.permute.xlu0 %788
      %790 = vrot.lane.b32.xlu0 %v724, 64
      %v791 = vpop.permute.xlu0 %790
      %792 = vrot.lane.b32.xlu0 %v725, 64
      %v793 = vpop.permute.xlu0 %792
      %801 = vst.msk [vmem:[#allocation4] sm:$0xff] %vm548, %v781
      %802 = vst.msk [vmem:[#allocation4 + $0x8] sm:$0xff] %vm548, %v783
      %803 = vst.msk [vmem:[#allocation4 + $0x10] sm:$0xff] %vm548, %v785
      %804 = vst.msk [vmem:[#allocation4 + $0x18] sm:$0xff] %vm548, %v787
      %805 = vst.msk [vmem:[#allocation4 + $0x20] sm:$0xff] %vm548, %v789
      %806 = vst.msk [vmem:[#allocation4 + $0x28] sm:$0xff] %vm548, %v791
      %807 = vst.msk [vmem:[#allocation4 + $0x30] sm:$0xff] %vm548, %v793
      %v808 = vld [vmem:[#allocation4] sm:$0xff]
      %v809 = vld [vmem:[#allocation4 + $0x8] sm:$0xff]
      %v810 = vld [vmem:[#allocation4 + $0x10] sm:$0xff]
      %v811 = vld [vmem:[#allocation4 + $0x18] sm:$0xff]
      %v812 = vld [vmem:[#allocation4 + $0x20] sm:$0xff]
      %v813 = vld [vmem:[#allocation4 + $0x28] sm:$0xff]
      %v814 = vld [vmem:[#allocation4 + $0x30] sm:$0xff]
      %v815 = vld [vmem:[#allocation4 + $0x38] sm:$0xff]
      %v816 = vld [vmem:[#allocation4 + $0x40] sm:$0xff]
      %v817 = vld [vmem:[#allocation4 + $0x48] sm:$0xff]
      %v818 = vld [vmem:[#allocation4 + $0x50] sm:$0xff]
      %v819 = vld [vmem:[%s5] sm:$0xff]
      %v820 = vld [vmem:[%s5 + $0x8] sm:$0xff]
      %v821 = vld [vmem:[%s5 + $0x10] sm:$0xff]
      %v822 = vld [vmem:[%s5 + $0x18] sm:$0xff]
      %v823 = vld [vmem:[%s5 + $0x20] sm:$0xff]
      %v824 = vld [vmem:[%s5 + $0x28] sm:$0xff]
      %v825 = vld [vmem:[%s5 + $0x30] sm:$0xff]
      %v826 = vld [vmem:[%s5 + $0x38] sm:$0xff]
      %v827 = vld [vmem:[%s5 + $0x40] sm:$0xff]
      %v828 = vld [vmem:[%s5 + $0x48] sm:$0xff]
      %v829 = vld [vmem:[%s5 + $0x50] sm:$0xff]
      %v830 = vld [vmem:[%s5 + $0x58] sm:$0xff]
      %v831 = vld [vmem:[%s6] sm:$0x1]
      %v833 = vlaneseq
      %v834 = vshrl.u32 %v833, 7
      %v835 = vsub.s32 0, %v834
      %v836 = vrot.slane %v831, %v835
      %v839 = vsel %vm597, %v808, 0
      %v842 = vsel %vm597, %v809, 0
      %v845 = vsel %vm597, %v810, 0
      %v848 = vsel %vm597, %v811, 0
      %v851 = vsel %vm597, %v812, 0
      %v854 = vsel %vm597, %v813, 0
      %v857 = vsel %vm597, %v814, 0
      %v860 = vsel %vm597, %v815, 0
      %v863 = vsel %vm597, %v816, 0
      %v866 = vsel %vm597, %v817, 0
      %v869 = vsel %vm597, %v818, 0
      %871 = vmatprep.subr.mxu0 0.0
      %872 = vmatpush1.msra.mxu0 %v819
      %873 = vmatprep.subr.mxu0 0.0
      %874 = vmatpush1.msra.mxu0 %v820
      %875 = vmatprep.subr.mxu0 0.0
      %876 = vmatpush1.msra.mxu0 %v821
      %877 = vmatprep.subr.mxu0 0.0
      %878 = vmatpush1.msra.mxu0 %v822
      %879 = vmatprep.subr.mxu0 0.0
      %880 = vmatpush1.msra.mxu0 %v823
      %881 = vmatprep.subr.mxu0 0.0
      %882 = vmatpush1.msra.mxu0 %v824
      %883 = vmatprep.subr.mxu0 0.0
      %884 = vmatpush1.msra.mxu0 %v825
      %885 = vmatprep.subr.mxu0 0.0
      %886 = vmatpush1.msra.mxu0 %v826
      %887 = vmatprep.subr.mxu0 0.0
      %888 = vmatpush1.msra.mxu0 %v827
      %889 = vmatprep.subr.mxu0 0.0
      %890 = vmatpush1.msra.mxu0 %v828
      %891 = vmatprep.subr.mxu0 0.0
      %892 = vmatpush1.msra.mxu0 %v829
      %893 = vmatprep.subr.mxu0 0.0
      %894 = vmatpush1.msra.mxu0 %v830
      %895 = vmatprep.subr.mxu0 0.0
      %896 = vmatpush1.msra.mxu0 0.0
      %897 = vmatprep.subr.mxu0 0.0
      %898 = vmatpush1.msra.mxu0 0.0
      %899 = vmatprep.subr.mxu0 0.0
      %900 = vmatpush1.msra.mxu0 0.0
      %901 = vmatprep.subr.mxu0 0.0
      %902 = vmatpush1.msra.mxu0 0.0
      %903 = vmatprep.subr.mxu0 0.0
      %904 = vmatpush1.msra.mxu0 0.0
      %905 = vmatprep.subr.mxu0 0.0
      %906 = vmatpush1.msra.mxu0 0.0
      %907 = vmatprep.subr.mxu0 0.0
      %908 = vmatpush1.msra.mxu0 0.0
      %909 = vmatprep.subr.mxu0 0.0
      %910 = vmatpush1.msra.mxu0 0.0
      %911 = vmatprep.subr.mxu0 0.0
      %912 = vmatpush1.msra.mxu0 0.0
      %913 = vmatprep.subr.mxu0 0.0
      %914 = vmatpush1.msra.mxu0 0.0
      %915 = vmatprep.subr.mxu0 0.0
      %916 = vmatpush1.msra.mxu0 0.0
      %917 = vmatprep.subr.mxu0 0.0
      %918 = vmatpush1.msra.mxu0 0.0
      %919 = vmatprep.subr.mxu0 0.0
      %920 = vmatpush1.msra.mxu0 0.0
      %921 = vmatprep.subr.mxu0 0.0
      %922 = vmatpush1.msra.mxu0 0.0
      %923 = vmatprep.subr.mxu0 0.0
      %924 = vmatpush1.msra.mxu0 0.0
      %925 = vmatprep.subr.mxu0 0.0
      %926 = vmatpush1.msra.mxu0 0.0
      %927 = vmatprep.subr.mxu0 0.0
      %928 = vmatpush1.msra.mxu0 0.0
      %929 = vmatprep.subr.mxu0 0.0
      %930 = vmatpush1.msra.mxu0 0.0
      %931 = vmatprep.subr.mxu0 0.0
      %932 = vmatpush1.msra.mxu0 0.0
      %933 = vmatprep.subr.mxu0 0.0
      %934 = vmatpush1.msra.mxu0 0.0
      %935 = vmatprep.mubr.f32.mxu0 0.0
      %936 = vmatmul.mubr.f32.gmra.mrb[0].mxu0 %v839
      %v937 = vpop.f32.mrb[0].mxu0
      %v938 = vadd.f32 %v836, %v937
      %v939 = vpop.f32.mrb[0].mxu0
      %940 = vmatprep.mubr.f32.mxu0 0.0
      %941 = vmatmul.mubr.f32.gmra.mrb[0].mxu0 %v842
      %v942 = vpop.f32.mrb[0].mxu0
      %v943 = vadd.f32 %v836, %v942
      %v944 = vpop.f32.mrb[0].mxu0
      %945 = vmatprep.mubr.f32.mxu0 0.0
      %946 = vmatmul.mubr.f32.gmra.mrb[0].mxu0 %v845
      %v947 = vpop.f32.mrb[0].mxu0
      %v948 = vadd.f32 %v836, %v947
      %v949 = vpop.f32.mrb[0].mxu0
      %950 = vmatprep.mubr.f32.mxu0 0.0
      %951 = vmatmul.mubr.f32.gmra.mrb[0].mxu0 %v848
      %v952 = vpop.f32.mrb[0].mxu0
      %v953 = vadd.f32 %v836, %v952
      %v954 = vpop.f32.mrb[0].mxu0
      %955 = vmatprep.mubr.f32.mxu0 0.0
      %956 = vmatmul.mubr.f32.gmra.mrb[0].mxu0 %v851
      %v957 = vpop.f32.mrb[0].mxu0
      %v958 = vadd.f32 %v836, %v957
      %v959 = vpop.f32.mrb[0].mxu0
      %960 = vmatprep.mubr.f32.mxu0 0.0
      %961 = vmatmul.mubr.f32.gmra.mrb[0].mxu0 %v854
      %v962 = vpop.f32.mrb[0].mxu0
      %v963 = vadd.f32 %v836, %v962
      %v964 = vpop.f32.mrb[0].mxu0
      %965 = vmatprep.mubr.f32.mxu0 0.0
      %966 = vmatmul.mubr.f32.gmra.mrb[0].mxu0 %v857
      %v967 = vpop.f32.mrb[0].mxu0
      %v968 = vadd.f32 %v836, %v967
      %v969 = vpop.f32.mrb[0].mxu0
      %970 = vmatprep.mubr.f32.mxu0 0.0
      %971 = vmatmul.mubr.f32.gmra.mrb[0].mxu0 %v860
      %v972 = vpop.f32.mrb[0].mxu0
      %v973 = vadd.f32 %v836, %v972
      %v974 = vpop.f32.mrb[0].mxu0
      %975 = vmatprep.mubr.f32.mxu0 0.0
      %976 = vmatmul.mubr.f32.gmra.mrb[0].mxu0 %v863
      %v977 = vpop.f32.mrb[0].mxu0
      %v978 = vadd.f32 %v836, %v977
      %v979 = vpop.f32.mrb[0].mxu0
      %980 = vmatprep.mubr.f32.mxu0 0.0
      %981 = vmatmul.mubr.f32.gmra.mrb[0].mxu0 %v866
      %v982 = vpop.f32.mrb[0].mxu0
      %v983 = vadd.f32 %v836, %v982
      %v984 = vpop.f32.mrb[0].mxu0
      %985 = vmatprep.mubr.f32.mxu0 0.0
      %986 = vmatmul.mubr.f32.gmra.mrb[0].mxu0 %v869
      %v987 = vpop.f32.mrb[0].mxu0
      %v988 = vadd.f32 %v836, %v987
      %v989 = vpop.f32.mrb[0].mxu0
      %990 = vdwg.mxu0
      %v991 = vmax.f32 %v938, 0.0
      %v992 = vmax.f32 %v943, 0.0
      %v993 = vmax.f32 %v948, 0.0
      %v994 = vmax.f32 %v953, 0.0
      %v995 = vmax.f32 %v958, 0.0
      %v996 = vmax.f32 %v963, 0.0
      %v997 = vmax.f32 %v968, 0.0
      %v998 = vmax.f32 %v973, 0.0
      %v999 = vmax.f32 %v978, 0.0
      %v1000 = vmax.f32 %v983, 0.0
      %v1001 = vmax.f32 %v988, 0.0
      %1002 = vst.msk [vmem:[#allocation5] sm:$0xff] %vm512, %v991
      %1003 = vst.msk [vmem:[#allocation5 + $0x8] sm:$0xff] %vm512, %v992
      %1004 = vst.msk [vmem:[#allocation5 + $0x10] sm:$0xff] %vm512, %v993
      %1005 = vst.msk [vmem:[#allocation5 + $0x18] sm:$0xff] %vm512, %v994
      %1006 = vst.msk [vmem:[#allocation5 + $0x20] sm:$0xff] %vm512, %v995
      %1007 = vst.msk [vmem:[#allocation5 + $0x28] sm:$0xff] %vm512, %v996
      %1008 = vst.msk [vmem:[#allocation5 + $0x30] sm:$0xff] %vm512, %v997
      %1009 = vst.msk [vmem:[#allocation5 + $0x38] sm:$0xff] %vm512, %v998
      %1010 = vst.msk [vmem:[#allocation5 + $0x40] sm:$0xff] %vm512, %v999
      %1011 = vst.msk [vmem:[#allocation5 + $0x48] sm:$0xff] %vm512, %v1000
      %1012 = vst.msk [vmem:[#allocation5 + $0x50] sm:$0xff] %vm512, %v1001
      %v1013 = vld [vmem:[#allocation5] sm:$0xf]
      %vm1014 = vcmask 257024
      %1015 = vst.msk [vmem:[#allocation6] sm:$0xf] %vm1014, %v1013
      %v1016 = vld [vmem:[#allocation5 + $0x4] sm:$0xf]
      %1018 = vrot.lane.b32.xlu0 %v1016, 32
      %v1019 = vpop.permute.xlu0 %1018
      %vm1021 = vcmask 519424
      %1022 = vst.msk [vmem:[#allocation6] sm:$0xf] %vm1021, %v1019
      %v1023 = vld [vmem:[#allocation5 + $0x8] sm:$0xf]
      %1025 = vrot.lane.b32.xlu0 %v1023, 64
      %v1026 = vpop.permute.xlu0 %1025
      %vm1028 = vcmask 781824
      %1029 = vst.msk [vmem:[#allocation6] sm:$0xf] %vm1028, %v1026
      %v1030 = vld [vmem:[#allocation5 + $0xc] sm:$0xf]
      %1032 = vrot.lane.b32.xlu0 %v1030, 96
      %v1033 = vpop.permute.xlu0 %1032
      %vm1035 = vcmask 1044224
      %1036 = vst.msk [vmem:[#allocation6] sm:$0xf] %vm1035, %v1033
      %v1037 = vld [vmem:[#allocation5 + $0x10] sm:$0xf]
      %1038 = vst.msk [vmem:[#allocation6 + $0x4] sm:$0xf] %vm1014, %v1037
      %v1039 = vld [vmem:[#allocation5 + $0x14] sm:$0xf]
      %1041 = vrot.lane.b32.xlu0 %v1039, 32
      %v1042 = vpop.permute.xlu0 %1041
      %1044 = vst.msk [vmem:[#allocation6 + $0x4] sm:$0xf] %vm1021, %v1042
      %v1045 = vld [vmem:[#allocation5 + $0x18] sm:$0xf]
      %1047 = vrot.lane.b32.xlu0 %v1045, 64
      %v1048 = vpop.permute.xlu0 %1047
      %1050 = vst.msk [vmem:[#allocation6 + $0x4] sm:$0xf] %vm1028, %v1048
      %v1051 = vld [vmem:[#allocation5 + $0x1c] sm:$0xf]
      %1053 = vrot.lane.b32.xlu0 %v1051, 96
      %v1054 = vpop.permute.xlu0 %1053
      %1056 = vst.msk [vmem:[#allocation6 + $0x4] sm:$0xf] %vm1035, %v1054
      %v1057 = vld [vmem:[#allocation5 + $0x20] sm:$0xf]
      %1058 = vst.msk [vmem:[#allocation6 + $0x8] sm:$0xf] %vm1014, %v1057
      %v1059 = vld [vmem:[#allocation5 + $0x24] sm:$0xf]
      %1061 = vrot.lane.b32.xlu0 %v1059, 32
      %v1062 = vpop.permute.xlu0 %1061
      %1064 = vst.msk [vmem:[#allocation6 + $0x8] sm:$0xf] %vm1021, %v1062
      %v1065 = vld [vmem:[#allocation5 + $0x28] sm:$0xf]
      %1067 = vrot.lane.b32.xlu0 %v1065, 64
      %v1068 = vpop.permute.xlu0 %1067
      %1070 = vst.msk [vmem:[#allocation6 + $0x8] sm:$0xf] %vm1028, %v1068
      %v1071 = vld [vmem:[#allocation5 + $0x2c] sm:$0xf]
      %1073 = vrot.lane.b32.xlu0 %v1071, 96
      %v1074 = vpop.permute.xlu0 %1073
      %1076 = vst.msk [vmem:[#allocation6 + $0x8] sm:$0xf] %vm1035, %v1074
      %v1077 = vld [vmem:[#allocation5 + $0x30] sm:$0xf]
      %1078 = vst.msk [vmem:[#allocation6 + $0xc] sm:$0xf] %vm1014, %v1077
      %v1079 = vld [vmem:[#allocation5 + $0x34] sm:$0xf]
      %1081 = vrot.lane.b32.xlu0 %v1079, 32
      %v1082 = vpop.permute.xlu0 %1081
      %1084 = vst.msk [vmem:[#allocation6 + $0xc] sm:$0xf] %vm1021, %v1082
      %v1085 = vld [vmem:[#allocation5 + $0x38] sm:$0xf]
      %1087 = vrot.lane.b32.xlu0 %v1085, 64
      %v1088 = vpop.permute.xlu0 %1087
      %1090 = vst.msk [vmem:[#allocation6 + $0xc] sm:$0xf] %vm1028, %v1088
      %v1091 = vld [vmem:[#allocation5 + $0x3c] sm:$0xf]
      %1093 = vrot.lane.b32.xlu0 %v1091, 96
      %v1094 = vpop.permute.xlu0 %1093
      %1096 = vst.msk [vmem:[#allocation6 + $0xc] sm:$0xf] %vm1035, %v1094
      %v1097 = vld [vmem:[#allocation5 + $0x40] sm:$0xf]
      %1098 = vst.msk [vmem:[#allocation6 + $0x10] sm:$0xf] %vm1014, %v1097
      %v1099 = vld [vmem:[#allocation5 + $0x44] sm:$0xf]
      %1101 = vrot.lane.b32.xlu0 %v1099, 32
      %v1102 = vpop.permute.xlu0 %1101
      %1104 = vst.msk [vmem:[#allocation6 + $0x10] sm:$0xf] %vm1021, %v1102
      %v1105 = vld [vmem:[#allocation5 + $0x48] sm:$0xf]
      %1107 = vrot.lane.b32.xlu0 %v1105, 64
      %v1108 = vpop.permute.xlu0 %1107
      %1110 = vst.msk [vmem:[#allocation6 + $0x10] sm:$0xf] %vm1028, %v1108
      %v1111 = vld [vmem:[#allocation5 + $0x4c] sm:$0xf]
      %1113 = vrot.lane.b32.xlu0 %v1111, 96
      %v1114 = vpop.permute.xlu0 %1113
      %1116 = vst.msk [vmem:[#allocation6 + $0x10] sm:$0xf] %vm1035, %v1114
      %v1117 = vld [vmem:[#allocation5 + $0x50] sm:$0xf]
      %1118 = vst.msk [vmem:[#allocation6 + $0x14] sm:$0xf] %vm1014, %v1117
      %v1119 = vld [vmem:[#allocation5 + $0x54] sm:$0xf]
      %1121 = vrot.lane.b32.xlu0 %v1119, 32
      %v1122 = vpop.permute.xlu0 %1121
      %1124 = vst.msk [vmem:[#allocation6 + $0x14] sm:$0xf] %vm1021, %v1122
      %v1125 = vld [vmem:[#allocation6] sm:$0xff]
      %v1126 = vld [vmem:[#allocation6 + $0x8] sm:$0xff]
      %v1127 = vld [vmem:[#allocation6 + $0x10] sm:$0xff]
      %v1128 = vld [vmem:[%s7] sm:$0xff]
      %v1129 = vld [vmem:[%s7 + $0x8] sm:$0xff]
      %v1130 = vld [vmem:[%s7 + $0x10] sm:$0xff]
      %v1131 = vld [vmem:[%s7 + $0x18] sm:$0xff]
      %v1132 = vld [vmem:[%s7 + $0x20] sm:$0xff]
      %v1133 = vld [vmem:[%s7 + $0x28] sm:$0xff]
      %v1134 = vld [vmem:[%s7 + $0x30] sm:$0xff]
      %v1135 = vld [vmem:[%s7 + $0x38] sm:$0xff]
      %v1136 = vld [vmem:[%s7 + $0x40] sm:$0xff]
      %v1137 = vld [vmem:[%s7 + $0x48] sm:$0xff]
      %v1138 = vld [vmem:[%s7 + $0x50] sm:$0xff]
      %v1139 = vld [vmem:[%s7 + $0x58] sm:$0xff]
      %v1140 = vld [vmem:[%s7 + $0x60] sm:$0xff]
      %v1141 = vld [vmem:[%s7 + $0x68] sm:$0xff]
      %v1142 = vld [vmem:[%s7 + $0x70] sm:$0xff]
      %v1143 = vld [vmem:[%s7 + $0x78] sm:$0xff]
      %v1144 = vld [vmem:[%s7 + $0x80] sm:$0xff]
      %v1145 = vld [vmem:[%s7 + $0x88] sm:$0xff]
      %v1146 = vld [vmem:[%s7 + $0x90] sm:$0xff]
      %v1147 = vld [vmem:[%s7 + $0x98] sm:$0xff]
      %v1148 = vld [vmem:[%s7 + $0xa0] sm:$0xff]
      %v1149 = vld [vmem:[%s7 + $0xa8] sm:$0xff]
      %v1150 = vld [vmem:[%s7 + $0xb0] sm:$0xff]
      %v1151 = vld [vmem:[%s7 + $0xb8] sm:$0xff]
      %v1152 = vld [vmem:[%s7 + $0xc0] sm:$0xff]
      %v1153 = vld [vmem:[%s7 + $0xc8] sm:$0xff]
      %v1154 = vld [vmem:[%s7 + $0xd0] sm:$0xff]
      %v1155 = vld [vmem:[%s7 + $0xd8] sm:$0xff]
      %v1156 = vld [vmem:[%s7 + $0xe0] sm:$0xff]
      %v1157 = vld [vmem:[%s7 + $0xe8] sm:$0xff]
      %v1158 = vld [vmem:[%s7 + $0xf0] sm:$0xff]
      %v1159 = vld [vmem:[%s7 + $0xf8] sm:$0xff]
      %v1160 = vld [vmem:[%s7 + $0x100] sm:$0xff]
      %v1161 = vld [vmem:[%s7 + $0x108] sm:$0xff]
      %v1162 = vld [vmem:[%s7 + $0x110] sm:$0xff]
      %v1163 = vld [vmem:[%s7 + $0x118] sm:$0xff]
      %v1164 = vld [vmem:[%s7 + $0x120] sm:$0xff]
      %v1165 = vld [vmem:[%s7 + $0x128] sm:$0xff]
      %v1166 = vld [vmem:[%s7 + $0x130] sm:$0xff]
      %v1167 = vld [vmem:[%s7 + $0x138] sm:$0xff]
      %v1168 = vld [vmem:[%s7 + $0x140] sm:$0xff]
      %v1169 = vld [vmem:[%s7 + $0x148] sm:$0xff]
      %v1170 = vld [vmem:[%s7 + $0x150] sm:$0xff]
      %v1171 = vld [vmem:[%s7 + $0x158] sm:$0xff]
      %v1172 = vld [vmem:[%s7 + $0x160] sm:$0xff]
      %v1173 = vld [vmem:[%s7 + $0x168] sm:$0xff]
      %v1174 = vld [vmem:[%s7 + $0x170] sm:$0xff]
      %v1175 = vld [vmem:[%s7 + $0x178] sm:$0xff]
      %v1176 = vld [vmem:[%s7 + $0x180] sm:$0xff]
      %v1177 = vld [vmem:[%s7 + $0x188] sm:$0xff]
      %v1178 = vld [vmem:[%s7 + $0x190] sm:$0xff]
      %v1179 = vld [vmem:[%s7 + $0x198] sm:$0xff]
      %v1180 = vld [vmem:[%s7 + $0x1a0] sm:$0xff]
      %v1181 = vld [vmem:[%s7 + $0x1a8] sm:$0xff]
      %v1182 = vld [vmem:[%s7 + $0x1b0] sm:$0xff]
      %v1183 = vld [vmem:[%s7 + $0x1b8] sm:$0xff]
      %v1184 = vld [vmem:[%s7 + $0x1c0] sm:$0xff]
      %v1185 = vld [vmem:[%s7 + $0x1c8] sm:$0xff]
      %v1186 = vld [vmem:[%s7 + $0x1d0] sm:$0xff]
      %v1187 = vld [vmem:[%s7 + $0x1d8] sm:$0xff]
      %v1188 = vld [vmem:[%s7 + $0x1e0] sm:$0xff]
      %v1189 = vld [vmem:[%s7 + $0x1e8] sm:$0xff]
      %v1190 = vld [vmem:[%s7 + $0x1f0] sm:$0xff]
      %v1191 = vld [vmem:[%s7 + $0x1f8] sm:$0xff]
      %v1192 = vld [vmem:[%s7 + $0x200] sm:$0xff]
      %v1193 = vld [vmem:[%s7 + $0x208] sm:$0xff]
      %v1194 = vld [vmem:[%s7 + $0x210] sm:$0xff]
      %v1195 = vld [vmem:[%s7 + $0x218] sm:$0xff]
      %v1196 = vld [vmem:[%s7 + $0x220] sm:$0xff]
      %v1197 = vld [vmem:[%s7 + $0x228] sm:$0xff]
      %v1198 = vld [vmem:[%s7 + $0x230] sm:$0xff]
      %v1199 = vld [vmem:[%s7 + $0x238] sm:$0xff]
      %v1200 = vld [vmem:[%s7 + $0x240] sm:$0xff]
      %v1201 = vld [vmem:[%s7 + $0x248] sm:$0xff]
      %v1202 = vld [vmem:[%s7 + $0x250] sm:$0xff]
      %v1203 = vld [vmem:[%s7 + $0x258] sm:$0xff]
      %v1204 = vld [vmem:[%s7 + $0x260] sm:$0xff]
      %v1205 = vld [vmem:[%s7 + $0x268] sm:$0xff]
      %v1206 = vld [vmem:[%s7 + $0x270] sm:$0xff]
      %v1207 = vld [vmem:[%s7 + $0x278] sm:$0xff]
      %v1208 = vld [vmem:[%s7 + $0x280] sm:$0xff]
      %v1209 = vld [vmem:[%s7 + $0x288] sm:$0xff]
      %v1210 = vld [vmem:[%s7 + $0x290] sm:$0xff]
      %v1211 = vld [vmem:[%s7 + $0x298] sm:$0xff]
      %v1212 = vld [vmem:[%s7 + $0x2a0] sm:$0xff]
      %v1213 = vld [vmem:[%s7 + $0x2a8] sm:$0xff]
      %v1214 = vld [vmem:[%s7 + $0x2b0] sm:$0xff]
      %v1215 = vld [vmem:[%s7 + $0x2b8] sm:$0xff]
      %v1216 = vld [vmem:[%s8] sm:$0x1]
      %v1218 = vlaneseq
      %v1219 = vshrl.u32 %v1218, 7
      %v1220 = vsub.s32 0, %v1219
      %v1221 = vrot.slane %v1216, %v1220
      %v1226 = vcombine.high %v1125, %v1125
      %v1227 = vcombine.high %v1126, %v1126
      %v1228 = vcombine.high %v1127, %v1127
      %vm1231 = vcmask 523264
      %v1232 = vsel %vm1231, %v1228, 0
      %1234 = vmatprep.subr.mxu0 0.0
      %1235 = vmatpush1.msra.mxu0 %v1128
      %1236 = vmatprep.subr.mxu0 0.0
      %1237 = vmatpush1.msra.mxu0 %v1129
      %1238 = vmatprep.subr.mxu0 0.0
      %1239 = vmatpush1.msra.mxu0 %v1130
      %1240 = vmatprep.subr.mxu0 0.0
      %1241 = vmatpush1.msra.mxu0 %v1131
      %1242 = vmatprep.subr.mxu0 0.0
      %1243 = vmatpush1.msra.mxu0 %v1132
      %1244 = vmatprep.subr.mxu0 0.0
      %1245 = vmatpush1.msra.mxu0 %v1133
      %1246 = vmatprep.subr.mxu0 0.0
      %1247 = vmatpush1.msra.mxu0 %v1134
      %1248 = vmatprep.subr.mxu0 0.0
      %1249 = vmatpush1.msra.mxu0 %v1135
      %1250 = vmatprep.subr.mxu0 0.0
      %1251 = vmatpush1.msra.mxu0 %v1136
      %1252 = vmatprep.subr.mxu0 0.0
      %1253 = vmatpush1.msra.mxu0 %v1137
      %1254 = vmatprep.subr.mxu0 0.0
      %1255 = vmatpush1.msra.mxu0 %v1138
      %1256 = vmatprep.subr.mxu0 0.0
      %1257 = vmatpush1.msra.mxu0 %v1139
      %1258 = vmatprep.subr.mxu0 0.0
      %1259 = vmatpush1.msra.mxu0 %v1140
      %1260 = vmatprep.subr.mxu0 0.0
      %1261 = vmatpush1.msra.mxu0 %v1141
      %1262 = vmatprep.subr.mxu0 0.0
      %1263 = vmatpush1.msra.mxu0 %v1142
      %1264 = vmatprep.subr.mxu0 0.0
      %1265 = vmatpush1.msra.mxu0 %v1143
      %1266 = vmatprep.subr.mxu0 0.0
      %1267 = vmatpush1.msra.mxu0 %v1144
      %1268 = vmatprep.subr.mxu0 0.0
      %1269 = vmatpush1.msra.mxu0 %v1145
      %1270 = vmatprep.subr.mxu0 0.0
      %1271 = vmatpush1.msra.mxu0 %v1146
      %1272 = vmatprep.subr.mxu0 0.0
      %1273 = vmatpush1.msra.mxu0 %v1147
      %1274 = vmatprep.subr.mxu0 0.0
      %1275 = vmatpush1.msra.mxu0 %v1148
      %1276 = vmatprep.subr.mxu0 0.0
      %1277 = vmatpush1.msra.mxu0 %v1149
      %1278 = vmatprep.subr.mxu0 0.0
      %1279 = vmatpush1.msra.mxu0 %v1150
      %1280 = vmatprep.subr.mxu0 0.0
      %1281 = vmatpush1.msra.mxu0 %v1151
      %1282 = vmatprep.subr.mxu0 0.0
      %1283 = vmatpush1.msra.mxu0 %v1152
      %1284 = vmatprep.subr.mxu0 0.0
      %1285 = vmatpush1.msra.mxu0 %v1153
      %1286 = vmatprep.subr.mxu0 0.0
      %1287 = vmatpush1.msra.mxu0 %v1154
      %1288 = vmatprep.subr.mxu0 0.0
      %1289 = vmatpush1.msra.mxu0 %v1155
      %1290 = vmatprep.subr.mxu0 0.0
      %1291 = vmatpush1.msra.mxu0 %v1156
      %1292 = vmatprep.subr.mxu0 0.0
      %1293 = vmatpush1.msra.mxu0 %v1157
      %1294 = vmatprep.subr.mxu0 0.0
      %1295 = vmatpush1.msra.mxu0 %v1158
      %1296 = vmatprep.subr.mxu0 0.0
      %1297 = vmatpush1.msra.mxu0 %v1159
      %1298 = vmatprep.mubr.f32.mxu0 %v1226
      %1299 = vmatmul.mubr.f32.gmra.mrb[0].mxu0 %v1125
      %v1300 = vpop.f32.mrb[0].mxu0
      %v1301 = vadd.f32 %v1221, %v1300
      %v1302 = vpop.f32.mrb[0].mxu0
      %1303 = vdwg.mxu0
      %1304 = vmatprep.subr.mxu0 0.0
      %1305 = vmatpush1.msra.mxu0 %v1160
      %1306 = vmatprep.subr.mxu0 0.0
      %1307 = vmatpush1.msra.mxu0 %v1161
      %1308 = vmatprep.subr.mxu0 0.0
      %1309 = vmatpush1.msra.mxu0 %v1162
      %1310 = vmatprep.subr.mxu0 0.0
      %1311 = vmatpush1.msra.mxu0 %v1163
      %1312 = vmatprep.subr.mxu0 0.0
      %1313 = vmatpush1.msra.mxu0 %v1164
      %1314 = vmatprep.subr.mxu0 0.0
      %1315 = vmatpush1.msra.mxu0 %v1165
      %1316 = vmatprep.subr.mxu0 0.0
      %1317 = vmatpush1.msra.mxu0 %v1166
      %1318 = vmatprep.subr.mxu0 0.0
      %1319 = vmatpush1.msra.mxu0 %v1167
      %1320 = vmatprep.subr.mxu0 0.0
      %1321 = vmatpush1.msra.mxu0 %v1168
      %1322 = vmatprep.subr.mxu0 0.0
      %1323 = vmatpush1.msra.mxu0 %v1169
      %1324 = vmatprep.subr.mxu0 0.0
      %1325 = vmatpush1.msra.mxu0 %v1170
      %1326 = vmatprep.subr.mxu0 0.0
      %1327 = vmatpush1.msra.mxu0 %v1171
      %1328 = vmatprep.subr.mxu0 0.0
      %1329 = vmatpush1.msra.mxu0 %v1172
      %1330 = vmatprep.subr.mxu0 0.0
      %1331 = vmatpush1.msra.mxu0 %v1173
      %1332 = vmatprep.subr.mxu0 0.0
      %1333 = vmatpush1.msra.mxu0 %v1174
      %1334 = vmatprep.subr.mxu0 0.0
      %1335 = vmatpush1.msra.mxu0 %v1175
      %1336 = vmatprep.subr.mxu0 0.0
      %1337 = vmatpush1.msra.mxu0 %v1176
      %1338 = vmatprep.subr.mxu0 0.0
      %1339 = vmatpush1.msra.mxu0 %v1177
      %1340 = vmatprep.subr.mxu0 0.0
      %1341 = vmatpush1.msra.mxu0 %v1178
      %1342 = vmatprep.subr.mxu0 0.0
      %1343 = vmatpush1.msra.mxu0 %v1179
      %1344 = vmatprep.subr.mxu0 0.0
      %1345 = vmatpush1.msra.mxu0 %v1180
      %1346 = vmatprep.subr.mxu0 0.0
      %1347 = vmatpush1.msra.mxu0 %v1181
      %1348 = vmatprep.subr.mxu0 0.0
      %1349 = vmatpush1.msra.mxu0 %v1182
      %1350 = vmatprep.subr.mxu0 0.0
      %1351 = vmatpush1.msra.mxu0 %v1183
      %1352 = vmatprep.subr.mxu0 0.0
      %1353 = vmatpush1.msra.mxu0 %v1184
      %1354 = vmatprep.subr.mxu0 0.0
      %1355 = vmatpush1.msra.mxu0 %v1185
      %1356 = vmatprep.subr.mxu0 0.0
      %1357 = vmatpush1.msra.mxu0 %v1186
      %1358 = vmatprep.subr.mxu0 0.0
      %1359 = vmatpush1.msra.mxu0 %v1187
      %1360 = vmatprep.subr.mxu0 0.0
      %1361 = vmatpush1.msra.mxu0 %v1188
      %1362 = vmatprep.subr.mxu0 0.0
      %1363 = vmatpush1.msra.mxu0 %v1189
      %1364 = vmatprep.subr.mxu0 0.0
      %1365 = vmatpush1.msra.mxu0 %v1190
      %1366 = vmatprep.subr.mxu0 0.0
      %1367 = vmatpush1.msra.mxu0 %v1191
      %1368 = vmatprep.mubr.f32.mxu0 %v1227
      %1369 = vmatmul.mubr.f32.gmra.mrb[0].mxu0 %v1126
      %v1370 = vpop.f32.mrb[0].mxu0
      %v1371 = vadd.f32 %v1301, %v1370
      %v1372 = vpop.f32.mrb[0].mxu0
      %1373 = vdwg.mxu0
      %1374 = vmatprep.subr.mxu0 0.0
      %1375 = vmatpush1.msra.mxu0 %v1192
      %1376 = vmatprep.subr.mxu0 0.0
      %1377 = vmatpush1.msra.mxu0 %v1193
      %1378 = vmatprep.subr.mxu0 0.0
      %1379 = vmatpush1.msra.mxu0 %v1194
      %1380 = vmatprep.subr.mxu0 0.0
      %1381 = vmatpush1.msra.mxu0 %v1195
      %1382 = vmatprep.subr.mxu0 0.0
      %1383 = vmatpush1.msra.mxu0 %v1196
      %1384 = vmatprep.subr.mxu0 0.0
      %1385 = vmatpush1.msra.mxu0 %v1197
      %1386 = vmatprep.subr.mxu0 0.0
      %1387 = vmatpush1.msra.mxu0 %v1198
      %1388 = vmatprep.subr.mxu0 0.0
      %1389 = vmatpush1.msra.mxu0 %v1199
      %1390 = vmatprep.subr.mxu0 0.0
      %1391 = vmatpush1.msra.mxu0 %v1200
      %1392 = vmatprep.subr.mxu0 0.0
      %1393 = vmatpush1.msra.mxu0 %v1201
      %1394 = vmatprep.subr.mxu0 0.0
      %1395 = vmatpush1.msra.mxu0 %v1202
      %1396 = vmatprep.subr.mxu0 0.0
      %1397 = vmatpush1.msra.mxu0 %v1203
      %1398 = vmatprep.subr.mxu0 0.0
      %1399 = vmatpush1.msra.mxu0 %v1204
      %1400 = vmatprep.subr.mxu0 0.0
      %1401 = vmatpush1.msra.mxu0 %v1205
      %1402 = vmatprep.subr.mxu0 0.0
      %1403 = vmatpush1.msra.mxu0 %v1206
      %1404 = vmatprep.subr.mxu0 0.0
      %1405 = vmatpush1.msra.mxu0 %v1207
      %1406 = vmatprep.subr.mxu0 0.0
      %1407 = vmatpush1.msra.mxu0 %v1208
      %1408 = vmatprep.subr.mxu0 0.0
      %1409 = vmatpush1.msra.mxu0 %v1209
      %1410 = vmatprep.subr.mxu0 0.0
      %1411 = vmatpush1.msra.mxu0 %v1210
      %1412 = vmatprep.subr.mxu0 0.0
      %1413 = vmatpush1.msra.mxu0 %v1211
      %1414 = vmatprep.subr.mxu0 0.0
      %1415 = vmatpush1.msra.mxu0 %v1212
      %1416 = vmatprep.subr.mxu0 0.0
      %1417 = vmatpush1.msra.mxu0 %v1213
      %1418 = vmatprep.subr.mxu0 0.0
      %1419 = vmatpush1.msra.mxu0 %v1214
      %1420 = vmatprep.subr.mxu0 0.0
      %1421 = vmatpush1.msra.mxu0 %v1215
      %1422 = vmatprep.subr.mxu0 0.0
      %1423 = vmatpush1.msra.mxu0 0.0
      %1424 = vmatprep.subr.mxu0 0.0
      %1425 = vmatpush1.msra.mxu0 0.0
      %1426 = vmatprep.subr.mxu0 0.0
      %1427 = vmatpush1.msra.mxu0 0.0
      %1428 = vmatprep.subr.mxu0 0.0
      %1429 = vmatpush1.msra.mxu0 0.0
      %1430 = vmatprep.subr.mxu0 0.0
      %1431 = vmatpush1.msra.mxu0 0.0
      %1432 = vmatprep.subr.mxu0 0.0
      %1433 = vmatpush1.msra.mxu0 0.0
      %1434 = vmatprep.subr.mxu0 0.0
      %1435 = vmatpush1.msra.mxu0 0.0
      %1436 = vmatprep.subr.mxu0 0.0
      %1437 = vmatpush1.msra.mxu0 0.0
      %1438 = vmatprep.mubr.f32.mxu0 %v1232
      %1439 = vmatmul.mubr.f32.gmra.mrb[0].mxu0 %v1127
      %v1440 = vpop.f32.mrb[0].mxu0
      %v1441 = vadd.f32 %v1371, %v1440
      %v1442 = vpop.f32.mrb[0].mxu0
      %1443 = vdwg.mxu0
      %vm1444 = vcmask 60416
      %1445 = vst.msk [vmem:[%s330] sm:$0xf] %vm1444, %v1441
      %p1446 = scmp.lt.s32.totalorder %s20, 1
      %s1447 = scalar_select %p1446, %s20, 1
      %s1448 = smul.addr %s1447, 4
      %s1449 = scalar_lea.vmem %s9, %s1448
      // Predicated region
      $region57: #{_lambda_.1} parent=55 // pred_check
        %p1450 = pneg %p232
      $region58: #{_lambda_.1} parent=55 // pred_check_branch
        %1452 = sbr.rel (%p1450) target = $region60
      $region59: #{_lambda_.1} parent=55 // pred_region
        _
      $region60: #{_lambda_.1} parent=55 // pred_fallthru
        _
    $region56: #{_lambda_.1} parent=5 // pred_fallthru
      _
    %p1453 = scmp.le.s32.totalorder 2, %s15
    // Predicated region
    $region61: #{_lambda_.1} parent=5 // pred_check
      %p1454 = pneg %p1453
    $region62: #{_lambda_.1} parent=5 // pred_check_branch
      %1456 = sbr.rel (%p1454) target = $region64
    $region63: #{_lambda_.1} parent=5 // pred_region
      %s1457 = ssub.s32 %s15, 2
      // Predicated region
      $region65: #{_lambda_.1} parent=63 // pred_check
        %p1458 = pneg %p238
      $region66: #{_lambda_.1} parent=63 // pred_check_branch
        %1460 = sbr.rel (%p1458) target = $region68
      $region67: #{_lambda_.1} parent=63 // pred_region
        %p1461 = scmp.lt.s32.totalorder %s21, 1
        %s1462 = scalar_select %p1461, %s21, 1
        %s1463 = smul.addr %s1462, 4
        %s1464 = scalar_lea.vmem %s9, %s1463
      $region68: #{_lambda_.1} parent=63 // pred_fallthru
        _
    $region64: #{_lambda_.1} parent=5 // pred_fallthru
      _
  $region6: #{_lambda_.1} parent=0 // loop_footer
    %s19 = sadd.s32 1, %s15
  $region7: #{_lambda_.1} parent=0 // loop_footer_branch
    %14 = sbr.rel target = $region3
  $region8: #{_lambda_.1} parent=0 // loop_exit
    _

</llo_original>
